<compile_context>
chip_gen: v7x
topology: tpu7x:2x2x1
jax: 0.10.0
libtpu: 0.0.40
codegen_flags: <defaults>
</compile_context>

<pallas_src>
import jax
import jax.numpy as jnp
from jax import lax
from jax.experimental import pallas as pl
from jax.experimental.pallas import tpu as pltpu

# ----------------------------- config (small, forward-consistent) ------------
VOCAB = 100
D_MODEL = 128          # hidden size (stand-in for distilbert hidden_size)
N_HEADS = 4
D_HEAD = D_MODEL // N_HEADS
D_FFN = 256
N_LAYERS = 2
NUM_LABELS = 2
FT_FFN = 8
LN_EPS = 1e-12


# ----------------------------- shared helpers --------------------------------
def _layernorm(x, g, b, eps=LN_EPS):
    mu = jnp.mean(x, axis=-1, keepdims=True)
    var = jnp.mean(jnp.square(x - mu), axis=-1, keepdims=True)
    return (x - mu) * lax.rsqrt(var + eps) * g + b


# ----------------------------- fused Pallas kernel ----------------------------
def fused_encoder_kernel(x_ref, mask_ref,
                         wqkv_ref, bqkv_ref, wo_ref, bo_ref,
                         ln1g_ref, ln1b_ref,
                         w1_ref, b1_ref, w2_ref, b2_ref,
                         ln2g_ref, ln2b_ref,
                         out_ref, x_sc):
    """grid = (batch_blocks, layer). Whole batch block per step; one encoder layer
    per step; lane-dense (BB, D) [CLS] hidden written on the last layer."""
    layer = pl.program_id(1)

    # Load the embedded/normalized input into the resident activation scratch once.
    @pl.when(layer == 0)
    def _():
        x_sc[...] = x_ref[...]

    xb = x_sc[...]                       # (BB, S, D) f32, resident across layer axis
    BB, S, D = xb.shape
    x = xb.reshape(BB * S, D)            # batch folded into MXU rows

    # ---- fused QKV projection: one (BB*S, D) x (D, 3D) MXU pass ----
    # 1/sqrt(D_HEAD) is pre-folded into the Q slice of wqkv/bqkv at init time.
    qkv = jnp.dot(x.astype(jnp.bfloat16), wqkv_ref[0],
                  preferred_element_type=jnp.float32) + bqkv_ref[0]   # (BB*S, 3D) f32
    qkv = qkv.astype(jnp.bfloat16)        # single cast, reused by score & context dots
    q = qkv[:, 0:D].reshape(BB, S, D)     # 128-lane-aligned slices (free)
    k = qkv[:, D:2 * D].reshape(BB, S, D)
    v = qkv[:, 2 * D:3 * D].reshape(BB, S, D)

    # (BB, S, D) -> (H*BB, S, Dh): per-head lane slices stacked on a single leading
    # batch axis (g = h*BB + b) so all attention einsums are 3-D / one batch dim.
    def heads(t):
        hs = [t[:, :, h * D_HEAD:(h + 1) * D_HEAD] for h in range(N_HEADS)]
        return jnp.stack(hs, axis=0).reshape(N_HEADS * BB, S, D_HEAD)

    qh, kh, vh = heads(q), heads(k), heads(v)                     # bf16 (G, S, Dh)

    s = jnp.einsum('gsd,gtd->gst', qh, kh,
                   preferred_element_type=jnp.float32)            # (G, S, S) f32
    # additive key mask, broadcast over heads and queries
    s = (s.reshape(N_HEADS, BB, S, S) + mask_ref[...][None]).reshape(N_HEADS * BB, S, S)
    s = s - jnp.max(s, axis=-1, keepdims=True)
    p = jnp.exp(s)
    p = p * pl.reciprocal(jnp.sum(p, axis=-1, keepdims=True), approx=True)

    ctx = jnp.einsum('gst,gtd->gsd', p.astype(jnp.bfloat16), vh,
                     preferred_element_type=jnp.float32)          # (G, S, Dh)

    # fold per-head output projection (avoids lane-axis concatenation):
    # (H*BB, S, Dh) -> (H, BB*S, Dh) is a pure leading-dim reshape (g = h*BB + b).
    ctx_h = ctx.reshape(N_HEADS, BB * S, D_HEAD).astype(jnp.bfloat16)
    wo3 = wo_ref[0].reshape(N_HEADS, D_HEAD, D)                   # bf16 (H, Dh, D)
    proj = jnp.einsum('hrd,hdk->hrk', ctx_h, wo3,
                      preferred_element_type=jnp.float32)         # (H, BB*S, D)
    attn = jnp.sum(proj, axis=0) + bo_ref[0]                      # (BB*S, D)

    h1 = _layernorm(attn + x, ln1g_ref[0], ln1b_ref[0])

    # ---- FFN ----
    f = jnp.dot(h1.astype(jnp.bfloat16), w1_ref[0],
                preferred_element_type=jnp.float32) + b1_ref[0]
    f = jax.nn.gelu(f, approximate=True)
    f = jnp.dot(f.astype(jnp.bfloat16), w2_ref[0],
                preferred_element_type=jnp.float32) + b2_ref[0]

    x_new = _layernorm(f + h1, ln2g_ref[0], ln2b_ref[0])          # (BB*S, D)
    x3 = x_new.reshape(BB, S, D)
    x_sc[...] = x3

    # ---- lane-dense epilogue: emit the (BB, 128) [CLS] hidden on the last layer ----
    @pl.when(layer == pl.num_programs(1) - 1)
    def _():
        out_ref[...] = x3[:, 0, :]                                # (BB, D)


# ----------------------------- wrapper -----------------------------------------
def _layer_spec(arr):
    """Stacked per-layer weight: block = one layer's slice, indexed by grid axis 1."""
    nzeros = arr.ndim - 1
    return pl.BlockSpec((1,) + arr.shape[1:],
                        lambda bb, l, _n=nzeros: (l,) + (0,) * _n)


def fused_encoder(x, mask_bias, enc, batch_block=None):
    B, S, D = x.shape
    # batch_block = B collapses the batch out of the grid (default, best for v5e/v6e);
    # batch_block = B // 2 splits the batch across v7x's two TensorCores.
    BB = B if batch_block is None else batch_block

    names = ["wqkv", "bqkv", "wo", "bo", "ln1_g", "ln1_b",
             "w1", "b1", "w2", "b2", "ln2_g", "ln2_b"]
    args = [enc[k] for k in names]

    in_specs = ([pl.BlockSpec((BB, S, D), lambda bb, l: (bb, 0, 0)),
                 pl.BlockSpec((BB, 1, S), lambda bb, l: (bb, 0, 0))]
                + [_layer_spec(a) for a in args])

    out = pl.pallas_call(
        fused_encoder_kernel,
        out_shape=jax.ShapeDtypeStruct((B, D), jnp.float32),
        grid=(B // BB, N_LAYERS),
        in_specs=in_specs,
        out_specs=pl.BlockSpec((BB, D), lambda bb, l: (bb, 0)),
        scratch_shapes=[pltpu.VMEM((BB, S, D), jnp.float32)],
        compiler_params=pltpu.CompilerParams(
            dimension_semantics=("parallel", "arbitrary")),
    )(x, mask_bias, *args)
    return out                                                     # (B, D) [CLS] hidden


# ----------------------------- classifier head (plain JAX, tiny) ----------------
def classifier_head_jax(cls_hidden, head):
    """pre_classifier (128->128) + ReLU + classifier (128->2); lane-sparse output
    kept in XLA per review (kernel output stays 128-lane dense)."""
    h = jnp.maximum(cls_hidden @ head["w_pre"] + head["b_pre"], 0.0)
    return h @ head["w_cls"] + head["b_cls"]


# ----------------------------- fine-tune block (plain JAX, tiny) ----------------
def finetune_block_jax(x, fp):
    """Transformer block over the (B, num_labels) logits (see TODO at top)."""
    scale = 1.0 / (float(NUM_LABELS) ** 0.5)
    q = x @ fp["wq"] + fp["bq"]
    k = x @ fp["wk"] + fp["bk"]
    v = x @ fp["wv"] + fp["bv"]
    p = jax.nn.softmax((q @ k.T) * scale, axis=-1)
    attn = (p @ v) @ fp["wo"] + fp["bo"]
    h1 = _layernorm(x + attn, fp["ln1_g"], fp["ln1_b"])
    f = jnp.maximum(h1 @ fp["w1"] + fp["b1"], 0.0)
    f = f @ fp["w2"] + fp["b2"]
    return _layernorm(h1 + f, fp["ln2_g"], fp["ln2_b"])


# ----------------------------- parameter init -----------------------------------
def init_params(key, seq_len):
    keys = iter(jax.random.split(key, 64))

    def w(din, dout):
        return jax.random.normal(next(keys), (din, dout), jnp.float32) * 0.02

    def b(dout):
        return jnp.zeros((1, dout), jnp.float32)

    params = {
        "word_emb": jax.random.normal(next(keys), (VOCAB, D_MODEL), jnp.float32) * 0.02,
        "pos_emb": jax.random.normal(next(keys), (seq_len, D_MODEL), jnp.float32) * 0.02,
        "emb_ln_g": jnp.ones((1, 1, D_MODEL), jnp.float32),
        "emb_ln_b": jnp.zeros((1, 1, D_MODEL), jnp.float32),
    }

    inv = 1.0 / (float(D_HEAD) ** 0.5)
    per_layer = []
    for _ in range(N_LAYERS):
        wq, wk, wv = w(D_MODEL, D_MODEL), w(D_MODEL, D_MODEL), w(D_MODEL, D_MODEL)
        bq, bk, bv = b(D_MODEL), b(D_MODEL), b(D_MODEL)
        per_layer.append({
            # fused QKV weight; 1/sqrt(D_HEAD) folded into the Q slice (one-time
            # param transform — no per-step scale multiply in the kernel).
            "wqkv": jnp.concatenate([wq * inv, wk, wv], axis=-1).astype(jnp.bfloat16),
            "bqkv": jnp.concatenate([bq * inv, bk, bv], axis=-1),
            "wo": w(D_MODEL, D_MODEL).astype(jnp.bfloat16), "bo": b(D_MODEL),
            "ln1_g": jnp.ones((1, D_MODEL), jnp.float32),
            "ln1_b": jnp.zeros((1, D_MODEL), jnp.float32),
            "w1": w(D_MODEL, D_FFN).astype(jnp.bfloat16), "b1": b(D_FFN),
            "w2": w(D_FFN, D_MODEL).astype(jnp.bfloat16), "b2": b(D_MODEL),
            "ln2_g": jnp.ones((1, D_MODEL), jnp.float32),
            "ln2_b": jnp.zeros((1, D_MODEL), jnp.float32),
        })
    # stack per-layer weights along a leading N_LAYERS axis for the fused kernel
    params["enc"] = {k: jnp.stack([lp[k] for lp in per_layer], axis=0)
                     for k in per_layer[0]}

    # head stays f32 — it runs in XLA now (no MXU bf16 requirement)
    params["head"] = {"w_pre": w(D_MODEL, D_MODEL), "b_pre": b(D_MODEL),
                      "w_cls": w(D_MODEL, NUM_LABELS), "b_cls": b(NUM_LABELS)}

    ft = {}
    for name, (din, dout) in [("wq", (NUM_LABELS, NUM_LABELS)), ("wk", (NUM_LABELS, NUM_LABELS)),
                              ("wv", (NUM_LABELS, NUM_LABELS)), ("wo", (NUM_LABELS, NUM_LABELS)),
                              ("w1", (NUM_LABELS, FT_FFN)), ("w2", (FT_FFN, NUM_LABELS))]:
        ft[name] = w(din, dout)
        ft["b" + name[1:]] = b(dout)
    ft["ln1_g"] = jnp.ones((1, NUM_LABELS), jnp.float32)
    ft["ln1_b"] = jnp.zeros((1, NUM_LABELS), jnp.float32)
    ft["ln2_g"] = jnp.ones((1, NUM_LABELS), jnp.float32)
    ft["ln2_b"] = jnp.zeros((1, NUM_LABELS), jnp.float32)
    params["ft"] = ft
    return params


# ----------------------------- full forward -------------------------------------
def forward(params, input_ids, attention_mask):
    # embeddings (gather is glue) + embedding LayerNorm
    x = jnp.take(params["word_emb"], input_ids, axis=0) + params["pos_emb"][None, :, :]
    x = _layernorm(x, params["emb_ln_g"], params["emb_ln_b"])

    mask_bias = (1.0 - attention_mask.astype(jnp.float32))[:, None, :] * -1e9  # (B,1,S)

    cls_hidden = fused_encoder(x, mask_bias, params["enc"])        # (B, D) lane-dense
    logits = classifier_head_jax(cls_hidden, params["head"])       # (B, 2)
    return finetune_block_jax(logits, params["ft"])                # (B, 2)


# ----------------------------- main ----------------------------------------------
if __name__ == "__main__":
    B, S = 2, 8
    key = jax.random.PRNGKey(0)
    pkey, ikey = jax.random.split(key)
    params = init_params(pkey, S)
    input_ids = jax.random.randint(ikey, (B, S), 0, VOCAB, dtype=jnp.int32)
    attention_mask = jnp.ones((B, S), jnp.float32)

    out = jax.jit(forward)(params, input_ids, attention_mask)
    out = jax.block_until_ready(out)
    assert out.shape == (B, NUM_LABELS) and out.dtype == jnp.float32
    print("KERNEL_OK")
</pallas_src>

<mosaic_0001>
module attributes {stable_mosaic.version = 11 : i64} {
  func.func @fused_encoder_kernel(%arg0: i32, %arg1: i32, %arg2: memref<2x8x128xf32, #tpu.memory_space<vmem>>, %arg3: memref<2x1x8xf32, #tpu.memory_space<vmem>>, %arg4: memref<1x128x384xbf16, #tpu.memory_space<vmem>>, %arg5: memref<1x1x384xf32, #tpu.memory_space<vmem>>, %arg6: memref<1x128x128xbf16, #tpu.memory_space<vmem>>, %arg7: memref<1x1x128xf32, #tpu.memory_space<vmem>>, %arg8: memref<1x1x128xf32, #tpu.memory_space<vmem>>, %arg9: memref<1x1x128xf32, #tpu.memory_space<vmem>>, %arg10: memref<1x128x256xbf16, #tpu.memory_space<vmem>>, %arg11: memref<1x1x256xf32, #tpu.memory_space<vmem>>, %arg12: memref<1x256x128xbf16, #tpu.memory_space<vmem>>, %arg13: memref<1x1x128xf32, #tpu.memory_space<vmem>>, %arg14: memref<1x1x128xf32, #tpu.memory_space<vmem>>, %arg15: memref<1x1x128xf32, #tpu.memory_space<vmem>>, %arg16: memref<2x128xf32, #tpu.memory_space<vmem>>, %arg17: memref<2x8x128xf32, #tpu.memory_space<vmem>>) attributes {dimension_semantics = [#tpu.dimension_semantics<parallel>, #tpu.dimension_semantics<arbitrary>], iteration_bounds = array<i64: 1, 2>, scalar_prefetch = 0 : i64, scratch_operands = 1 : i64, tpu.core_type = #tpu.core_type<tc>, window_params = [{transform_indices = @transform_0, window_bounds = array<i64: 2, 8, 128>}, {transform_indices = @transform_1, window_bounds = array<i64: 2, 1, 8>}, {transform_indices = @transform_2, window_bounds = array<i64: 1, 128, 384>}, {transform_indices = @transform_3, window_bounds = array<i64: 1, 1, 384>}, {transform_indices = @transform_4, window_bounds = array<i64: 1, 128, 128>}, {transform_indices = @transform_5, window_bounds = array<i64: 1, 1, 128>}, {transform_indices = @transform_6, window_bounds = array<i64: 1, 1, 128>}, {transform_indices = @transform_7, window_bounds = array<i64: 1, 1, 128>}, {transform_indices = @transform_8, window_bounds = array<i64: 1, 128, 256>}, {transform_indices = @transform_9, window_bounds = array<i64: 1, 1, 256>}, {transform_indices = @transform_10, window_bounds = array<i64: 1, 256, 128>}, {transform_indices = @transform_11, window_bounds = array<i64: 1, 1, 128>}, {transform_indices = @transform_12, window_bounds = array<i64: 1, 1, 128>}, {transform_indices = @transform_13, window_bounds = array<i64: 1, 1, 128>}, {transform_indices = @transform_14, window_bounds = array<i64: 2, 128>}]} {
    %c0_i32 = arith.constant 0 : i32
    %0 = arith.cmpi eq, %arg1, %c0_i32 : i32
    %1 = arith.extui %0 : i1 to i32
    %c0_i32_0 = arith.constant 0 : i32
    %2 = arith.cmpi ne, %1, %c0_i32_0 : i32
    scf.if %2 {
      %c0_68 = arith.constant 0 : index
      %c0_69 = arith.constant 0 : index
      %c0_70 = arith.constant 0 : index
      %168 = vector.load %arg2[%c0_68, %c0_69, %c0_70] : memref<2x8x128xf32, #tpu.memory_space<vmem>>, vector<2x8x128xf32>
      %c0_71 = arith.constant 0 : index
      %c0_72 = arith.constant 0 : index
      %c0_73 = arith.constant 0 : index
      %169 = vector.load %arg17[%c0_71, %c0_72, %c0_73] : memref<2x8x128xf32, #tpu.memory_space<vmem>>, vector<2x8x128xf32>
      tpu.vector_store %arg17[%c0_71, %c0_72, %c0_73], %168 {strides = array<i32>} : memref<2x8x128xf32, #tpu.memory_space<vmem>>, vector<2x8x128xf32>,
    } else {
    }
    %c0 = arith.constant 0 : index
    %c0_1 = arith.constant 0 : index
    %c0_2 = arith.constant 0 : index
    %3 = vector.load %arg17[%c0, %c0_1, %c0_2] : memref<2x8x128xf32, #tpu.memory_space<vmem>>, vector<2x8x128xf32>
    %4 = vector.shape_cast %3 : vector<2x8x128xf32> to vector<16x128xf32>
    %5 = arith.truncf %4 : vector<16x128xf32> to vector<16x128xbf16>
    %c0_3 = arith.constant 0 : index
    %c0_4 = arith.constant 0 : index
    %c0_5 = arith.constant 0 : index
    %6 = vector.load %arg4[%c0_3, %c0_4, %c0_5] : memref<1x128x384xbf16, #tpu.memory_space<vmem>>, vector<1x128x384xbf16>
    %7 = vector.shape_cast %6 : vector<1x128x384xbf16> to vector<128x384xbf16>
    %cst = arith.constant dense<0.000000e+00> : vector<16x384xf32>
    %8 = tpu.matmul %5, %7, %cst {dimension_numbers = #tpu.dot_dimension_numbers<[1], [0], [0], [1], [0, 0, 1, 1], [], []>} : vector<16x128xbf16>, vector<128x384xbf16>, vector<16x384xf32> -> vector<16x384xf32>
    %c0_6 = arith.constant 0 : index
    %c0_7 = arith.constant 0 : index
    %c0_8 = arith.constant 0 : index
    %9 = vector.load %arg5[%c0_6, %c0_7, %c0_8] : memref<1x1x384xf32, #tpu.memory_space<vmem>>, vector<1x1x384xf32>
    %10 = vector.shape_cast %9 : vector<1x1x384xf32> to vector<1x384xf32>
    %11 = vector.broadcast %10 : vector<1x384xf32> to vector<16x384xf32>
    %12 = arith.addf %8, %11 : vector<16x384xf32>
    %13 = arith.truncf %12 : vector<16x384xf32> to vector<16x384xbf16>
    %14 = vector.extract_strided_slice %13 {offsets = [0, 0], sizes = [16, 128], strides = [1, 1]} : vector<16x384xbf16> to vector<16x128xbf16>
    %15 = vector.shape_cast %14 : vector<16x128xbf16> to vector<2x8x128xbf16>
    %16 = vector.extract_strided_slice %13 {offsets = [0, 128], sizes = [16, 128], strides = [1, 1]} : vector<16x384xbf16> to vector<16x128xbf16>
    %17 = vector.shape_cast %16 : vector<16x128xbf16> to vector<2x8x128xbf16>
    %18 = vector.extract_strided_slice %13 {offsets = [0, 256], sizes = [16, 128], strides = [1, 1]} : vector<16x384xbf16> to vector<16x128xbf16>
    %19 = vector.shape_cast %18 : vector<16x128xbf16> to vector<2x8x128xbf16>
    %20 = vector.extract_strided_slice %15 {offsets = [0, 0, 0], sizes = [2, 8, 32], strides = [1, 1, 1]} : vector<2x8x128xbf16> to vector<2x8x32xbf16>
    %21 = vector.extract_strided_slice %15 {offsets = [0, 0, 32], sizes = [2, 8, 32], strides = [1, 1, 1]} : vector<2x8x128xbf16> to vector<2x8x32xbf16>
    %22 = vector.extract_strided_slice %15 {offsets = [0, 0, 64], sizes = [2, 8, 32], strides = [1, 1, 1]} : vector<2x8x128xbf16> to vector<2x8x32xbf16>
    %23 = vector.extract_strided_slice %15 {offsets = [0, 0, 96], sizes = [2, 8, 32], strides = [1, 1, 1]} : vector<2x8x128xbf16> to vector<2x8x32xbf16>
    %24 = vector.shape_cast %20 : vector<2x8x32xbf16> to vector<1x2x8x32xbf16>
    %25 = vector.shape_cast %21 : vector<2x8x32xbf16> to vector<1x2x8x32xbf16>
    %26 = vector.shape_cast %22 : vector<2x8x32xbf16> to vector<1x2x8x32xbf16>
    %27 = vector.shape_cast %23 : vector<2x8x32xbf16> to vector<1x2x8x32xbf16>
    %28 = tpu.concatenate %24, %25, %26, %27 in 0 : vector<1x2x8x32xbf16>, vector<1x2x8x32xbf16>, vector<1x2x8x32xbf16>, vector<1x2x8x32xbf16> -> vector<4x2x8x32xbf16>
    %29 = vector.shape_cast %28 : vector<4x2x8x32xbf16> to vector<8x8x32xbf16>
    %30 = vector.extract_strided_slice %17 {offsets = [0, 0, 0], sizes = [2, 8, 32], strides = [1, 1, 1]} : vector<2x8x128xbf16> to vector<2x8x32xbf16>
    %31 = vector.extract_strided_slice %17 {offsets = [0, 0, 32], sizes = [2, 8, 32], strides = [1, 1, 1]} : vector<2x8x128xbf16> to vector<2x8x32xbf16>
    %32 = vector.extract_strided_slice %17 {offsets = [0, 0, 64], sizes = [2, 8, 32], strides = [1, 1, 1]} : vector<2x8x128xbf16> to vector<2x8x32xbf16>
    %33 = vector.extract_strided_slice %17 {offsets = [0, 0, 96], sizes = [2, 8, 32], strides = [1, 1, 1]} : vector<2x8x128xbf16> to vector<2x8x32xbf16>
    %34 = vector.shape_cast %30 : vector<2x8x32xbf16> to vector<1x2x8x32xbf16>
    %35 = vector.shape_cast %31 : vector<2x8x32xbf16> to vector<1x2x8x32xbf16>
    %36 = vector.shape_cast %32 : vector<2x8x32xbf16> to vector<1x2x8x32xbf16>
    %37 = vector.shape_cast %33 : vector<2x8x32xbf16> to vector<1x2x8x32xbf16>
    %38 = tpu.concatenate %34, %35, %36, %37 in 0 : vector<1x2x8x32xbf16>, vector<1x2x8x32xbf16>, vector<1x2x8x32xbf16>, vector<1x2x8x32xbf16> -> vector<4x2x8x32xbf16>
    %39 = vector.shape_cast %38 : vector<4x2x8x32xbf16> to vector<8x8x32xbf16>
    %40 = vector.extract_strided_slice %19 {offsets = [0, 0, 0], sizes = [2, 8, 32], strides = [1, 1, 1]} : vector<2x8x128xbf16> to vector<2x8x32xbf16>
    %41 = vector.extract_strided_slice %19 {offsets = [0, 0, 32], sizes = [2, 8, 32], strides = [1, 1, 1]} : vector<2x8x128xbf16> to vector<2x8x32xbf16>
    %42 = vector.extract_strided_slice %19 {offsets = [0, 0, 64], sizes = [2, 8, 32], strides = [1, 1, 1]} : vector<2x8x128xbf16> to vector<2x8x32xbf16>
    %43 = vector.extract_strided_slice %19 {offsets = [0, 0, 96], sizes = [2, 8, 32], strides = [1, 1, 1]} : vector<2x8x128xbf16> to vector<2x8x32xbf16>
    %44 = vector.shape_cast %40 : vector<2x8x32xbf16> to vector<1x2x8x32xbf16>
    %45 = vector.shape_cast %41 : vector<2x8x32xbf16> to vector<1x2x8x32xbf16>
    %46 = vector.shape_cast %42 : vector<2x8x32xbf16> to vector<1x2x8x32xbf16>
    %47 = vector.shape_cast %43 : vector<2x8x32xbf16> to vector<1x2x8x32xbf16>
    %48 = tpu.concatenate %44, %45, %46, %47 in 0 : vector<1x2x8x32xbf16>, vector<1x2x8x32xbf16>, vector<1x2x8x32xbf16>, vector<1x2x8x32xbf16> -> vector<4x2x8x32xbf16>
    %49 = vector.shape_cast %48 : vector<4x2x8x32xbf16> to vector<8x8x32xbf16>
    "tpu.trace_start"() <{level = 10 : i32, message = "gsd,gtd->gst"}> : () -> ()
    %cst_9 = arith.constant dense<0.000000e+00> : vector<8x8x8xf32>
    %50 = tpu.matmul %29, %39, %cst_9 {dimension_numbers = #tpu.dot_dimension_numbers<[2], [2], [1], [1], [0, 0, 0, 1, 1, 1], [0], [0]>} : vector<8x8x32xbf16>, vector<8x8x32xbf16>, vector<8x8x8xf32> -> vector<8x8x8xf32>
    "tpu.trace_stop"() : () -> ()
    %51 = vector.shape_cast %50 : vector<8x8x8xf32> to vector<4x2x8x8xf32>
    %c0_10 = arith.constant 0 : index
    %c0_11 = arith.constant 0 : index
    %c0_12 = arith.constant 0 : index
    %52 = vector.load %arg3[%c0_10, %c0_11, %c0_12] : memref<2x1x8xf32, #tpu.memory_space<vmem>>, vector<2x1x8xf32>
    %53 = vector.shape_cast %52 : vector<2x1x8xf32> to vector<1x2x1x8xf32>
    %54 = vector.broadcast %53 : vector<1x2x1x8xf32> to vector<4x2x8x8xf32>
    %55 = arith.addf %51, %54 : vector<4x2x8x8xf32>
    %56 = vector.shape_cast %55 : vector<4x2x8x8xf32> to vector<8x8x8xf32>
    %cst_13 = arith.constant dense<0xFF800000> : vector<8x8xf32>
    %57 = vector.multi_reduction <maximumf>, %56, %cst_13 [2] : vector<8x8x8xf32> to vector<8x8xf32>
    %58 = vector.shape_cast %57 : vector<8x8xf32> to vector<8x8x1xf32>
    %59 = vector.broadcast %58 : vector<8x8x1xf32> to vector<8x8x8xf32>
    %60 = arith.subf %56, %59 : vector<8x8x8xf32>
    %61 = math.exp %60 : vector<8x8x8xf32>
    %cst_14 = arith.constant dense<0.000000e+00> : vector<8x8xf32>
    %62 = vector.multi_reduction <add>, %61, %cst_14 [2] : vector<8x8x8xf32> to vector<8x8xf32>
    %63 = vector.shape_cast %62 : vector<8x8xf32> to vector<8x8x1xf32>
    %64 = tpu.reciprocal %63 {approx = true} : vector<8x8x1xf32> -> vector<8x8x1xf32>
    %65 = vector.broadcast %64 : vector<8x8x1xf32> to vector<8x8x8xf32>
    %66 = arith.mulf %61, %65 : vector<8x8x8xf32>
    %67 = arith.truncf %66 : vector<8x8x8xf32> to vector<8x8x8xbf16>
    "tpu.trace_start"() <{level = 10 : i32, message = "gst,gtd->gsd"}> : () -> ()
    %cst_15 = arith.constant dense<0.000000e+00> : vector<8x8x32xf32>
    %68 = tpu.matmul %67, %49, %cst_15 {dimension_numbers = #tpu.dot_dimension_numbers<[2], [1], [1], [2], [0, 0, 0, 1, 1, 2], [0], [0]>} : vector<8x8x8xbf16>, vector<8x8x32xbf16>, vector<8x8x32xf32> -> vector<8x8x32xf32>
    "tpu.trace_stop"() : () -> ()
    %69 = vector.shape_cast %68 : vector<8x8x32xf32> to vector<4x16x32xf32>
    %70 = arith.truncf %69 : vector<4x16x32xf32> to vector<4x16x32xbf16>
    %c0_16 = arith.constant 0 : index
    %c0_17 = arith.constant 0 : index
    %c0_18 = arith.constant 0 : index
    %71 = vector.load %arg6[%c0_16, %c0_17, %c0_18] : memref<1x128x128xbf16, #tpu.memory_space<vmem>>, vector<1x128x128xbf16>
    %72 = vector.shape_cast %71 : vector<1x128x128xbf16> to vector<128x128xbf16>
    %73 = vector.shape_cast %72 : vector<128x128xbf16> to vector<4x32x128xbf16>
    "tpu.trace_start"() <{level = 10 : i32, message = "hrd,hdk->hrk"}> : () -> ()
    %cst_19 = arith.constant dense<0.000000e+00> : vector<4x16x128xf32>
    %74 = tpu.matmul %70, %73, %cst_19 {dimension_numbers = #tpu.dot_dimension_numbers<[2], [1], [1], [2], [0, 0, 0, 1, 1, 2], [0], [0]>} : vector<4x16x32xbf16>, vector<4x32x128xbf16>, vector<4x16x128xf32> -> vector<4x16x128xf32>
    "tpu.trace_stop"() : () -> ()
    %cst_20 = arith.constant dense<0.000000e+00> : vector<16x128xf32>
    %75 = vector.multi_reduction <add>, %74, %cst_20 [0] : vector<4x16x128xf32> to vector<16x128xf32>
    %c0_21 = arith.constant 0 : index
    %c0_22 = arith.constant 0 : index
    %c0_23 = arith.constant 0 : index
    %76 = vector.load %arg7[%c0_21, %c0_22, %c0_23] : memref<1x1x128xf32, #tpu.memory_space<vmem>>, vector<1x1x128xf32>
    %77 = vector.shape_cast %76 : vector<1x1x128xf32> to vector<1x128xf32>
    %78 = vector.broadcast %77 : vector<1x128xf32> to vector<16x128xf32>
    %79 = arith.addf %75, %78 : vector<16x128xf32>
    %80 = arith.addf %79, %4 : vector<16x128xf32>
    %c0_24 = arith.constant 0 : index
    %c0_25 = arith.constant 0 : index
    %c0_26 = arith.constant 0 : index
    %81 = vector.load %arg8[%c0_24, %c0_25, %c0_26] : memref<1x1x128xf32, #tpu.memory_space<vmem>>, vector<1x1x128xf32>
    %82 = vector.shape_cast %81 : vector<1x1x128xf32> to vector<1x128xf32>
    %c0_27 = arith.constant 0 : index
    %c0_28 = arith.constant 0 : index
    %c0_29 = arith.constant 0 : index
    %83 = vector.load %arg9[%c0_27, %c0_28, %c0_29] : memref<1x1x128xf32, #tpu.memory_space<vmem>>, vector<1x1x128xf32>
    %84 = vector.shape_cast %83 : vector<1x1x128xf32> to vector<1x128xf32>
    %cst_30 = arith.constant dense<0.000000e+00> : vector<16xf32>
    %85 = vector.multi_reduction <add>, %80, %cst_30 [1] : vector<16x128xf32> to vector<16xf32>
    %86 = vector.shape_cast %85 : vector<16xf32> to vector<16x1xf32>
    %cst_31 = arith.constant 1.280000e+02 : f32
    %87 = vector.broadcast %cst_31 : f32 to vector<16x1xf32>
    %88 = arith.divf %86, %87 : vector<16x1xf32>
    %89 = vector.broadcast %88 : vector<16x1xf32> to vector<16x128xf32>
    %90 = arith.subf %80, %89 : vector<16x128xf32>
    %91 = arith.mulf %90, %90 : vector<16x128xf32>
    %cst_32 = arith.constant dense<0.000000e+00> : vector<16xf32>
    %92 = vector.multi_reduction <add>, %91, %cst_32 [1] : vector<16x128xf32> to vector<16xf32>
    %93 = vector.shape_cast %92 : vector<16xf32> to vector<16x1xf32>
    %cst_33 = arith.constant 1.280000e+02 : f32
    %94 = vector.broadcast %cst_33 : f32 to vector<16x1xf32>
    %95 = arith.divf %93, %94 : vector<16x1xf32>
    %96 = vector.broadcast %88 : vector<16x1xf32> to vector<16x128xf32>
    %97 = arith.subf %80, %96 : vector<16x128xf32>
    %cst_34 = arith.constant 9.99999996E-13 : f32
    %98 = vector.broadcast %cst_34 : f32 to vector<16x1xf32>
    %99 = arith.addf %95, %98 : vector<16x1xf32>
    %100 = math.rsqrt %99 : vector<16x1xf32>
    %101 = vector.broadcast %100 : vector<16x1xf32> to vector<16x128xf32>
    %102 = arith.mulf %97, %101 : vector<16x128xf32>
    %103 = vector.broadcast %82 : vector<1x128xf32> to vector<16x128xf32>
    %104 = arith.mulf %102, %103 : vector<16x128xf32>
    %105 = vector.broadcast %84 : vector<1x128xf32> to vector<16x128xf32>
    %106 = arith.addf %104, %105 : vector<16x128xf32>
    %107 = arith.truncf %106 : vector<16x128xf32> to vector<16x128xbf16>
    %c0_35 = arith.constant 0 : index
    %c0_36 = arith.constant 0 : index
    %c0_37 = arith.constant 0 : index
    %108 = vector.load %arg10[%c0_35, %c0_36, %c0_37] : memref<1x128x256xbf16, #tpu.memory_space<vmem>>, vector<1x128x256xbf16>
    %109 = vector.shape_cast %108 : vector<1x128x256xbf16> to vector<128x256xbf16>
    %cst_38 = arith.constant dense<0.000000e+00> : vector<16x256xf32>
    %110 = tpu.matmul %107, %109, %cst_38 {dimension_numbers = #tpu.dot_dimension_numbers<[1], [0], [0], [1], [0, 0, 1, 1], [], []>} : vector<16x128xbf16>, vector<128x256xbf16>, vector<16x256xf32> -> vector<16x256xf32>
    %c0_39 = arith.constant 0 : index
    %c0_40 = arith.constant 0 : index
    %c0_41 = arith.constant 0 : index
    %111 = vector.load %arg11[%c0_39, %c0_40, %c0_41] : memref<1x1x256xf32, #tpu.memory_space<vmem>>, vector<1x1x256xf32>
    %112 = vector.shape_cast %111 : vector<1x1x256xf32> to vector<1x256xf32>
    %113 = vector.broadcast %112 : vector<1x256xf32> to vector<16x256xf32>
    %114 = arith.addf %110, %113 : vector<16x256xf32>
    %115 = arith.mulf %114, %114 : vector<16x256xf32>
    %116 = arith.mulf %114, %115 : vector<16x256xf32>
    %cst_42 = arith.constant 4.471500e-02 : f32
    %117 = vector.broadcast %cst_42 : f32 to vector<16x256xf32>
    %118 = arith.mulf %117, %116 : vector<16x256xf32>
    %119 = arith.addf %114, %118 : vector<16x256xf32>
    %cst_43 = arith.constant 0.797884583 : f32
    %120 = vector.broadcast %cst_43 : f32 to vector<16x256xf32>
    %121 = arith.mulf %120, %119 : vector<16x256xf32>
    %122 = math.tanh %121 : vector<16x256xf32>
    %cst_44 = arith.constant 1.000000e+00 : f32
    %123 = vector.broadcast %cst_44 : f32 to vector<16x256xf32>
    %124 = arith.addf %123, %122 : vector<16x256xf32>
    %cst_45 = arith.constant 5.000000e-01 : f32
    %125 = vector.broadcast %cst_45 : f32 to vector<16x256xf32>
    %126 = arith.mulf %125, %124 : vector<16x256xf32>
    %127 = arith.mulf %114, %126 : vector<16x256xf32>
    %128 = arith.truncf %127 : vector<16x256xf32> to vector<16x256xbf16>
    %c0_46 = arith.constant 0 : index
    %c0_47 = arith.constant 0 : index
    %c0_48 = arith.constant 0 : index
    %129 = vector.load %arg12[%c0_46, %c0_47, %c0_48] : memref<1x256x128xbf16, #tpu.memory_space<vmem>>, vector<1x256x128xbf16>
    %130 = vector.shape_cast %129 : vector<1x256x128xbf16> to vector<256x128xbf16>
    %cst_49 = arith.constant dense<0.000000e+00> : vector<16x128xf32>
    %131 = tpu.matmul %128, %130, %cst_49 {dimension_numbers = #tpu.dot_dimension_numbers<[1], [0], [0], [1], [0, 0, 1, 1], [], []>} : vector<16x256xbf16>, vector<256x128xbf16>, vector<16x128xf32> -> vector<16x128xf32>
    %c0_50 = arith.constant 0 : index
    %c0_51 = arith.constant 0 : index
    %c0_52 = arith.constant 0 : index
    %132 = vector.load %arg13[%c0_50, %c0_51, %c0_52] : memref<1x1x128xf32, #tpu.memory_space<vmem>>, vector<1x1x128xf32>
    %133 = vector.shape_cast %132 : vector<1x1x128xf32> to vector<1x128xf32>
    %134 = vector.broadcast %133 : vector<1x128xf32> to vector<16x128xf32>
    %135 = arith.addf %131, %134 : vector<16x128xf32>
    %136 = arith.addf %135, %106 : vector<16x128xf32>
    %c0_53 = arith.constant 0 : index
    %c0_54 = arith.constant 0 : index
    %c0_55 = arith.constant 0 : index
    %137 = vector.load %arg14[%c0_53, %c0_54, %c0_55] : memref<1x1x128xf32, #tpu.memory_space<vmem>>, vector<1x1x128xf32>
    %138 = vector.shape_cast %137 : vector<1x1x128xf32> to vector<1x128xf32>
    %c0_56 = arith.constant 0 : index
    %c0_57 = arith.constant 0 : index
    %c0_58 = arith.constant 0 : index
    %139 = vector.load %arg15[%c0_56, %c0_57, %c0_58] : memref<1x1x128xf32, #tpu.memory_space<vmem>>, vector<1x1x128xf32>
    %140 = vector.shape_cast %139 : vector<1x1x128xf32> to vector<1x128xf32>
    %cst_59 = arith.constant dense<0.000000e+00> : vector<16xf32>
    %141 = vector.multi_reduction <add>, %136, %cst_59 [1] : vector<16x128xf32> to vector<16xf32>
    %142 = vector.shape_cast %141 : vector<16xf32> to vector<16x1xf32>
    %cst_60 = arith.constant 1.280000e+02 : f32
    %143 = vector.broadcast %cst_60 : f32 to vector<16x1xf32>
    %144 = arith.divf %142, %143 : vector<16x1xf32>
    %145 = vector.broadcast %144 : vector<16x1xf32> to vector<16x128xf32>
    %146 = arith.subf %136, %145 : vector<16x128xf32>
    %147 = arith.mulf %146, %146 : vector<16x128xf32>
    %cst_61 = arith.constant dense<0.000000e+00> : vector<16xf32>
    %148 = vector.multi_reduction <add>, %147, %cst_61 [1] : vector<16x128xf32> to vector<16xf32>
    %149 = vector.shape_cast %148 : vector<16xf32> to vector<16x1xf32>
    %cst_62 = arith.constant 1.280000e+02 : f32
    %150 = vector.broadcast %cst_62 : f32 to vector<16x1xf32>
    %151 = arith.divf %149, %150 : vector<16x1xf32>
    %152 = vector.broadcast %144 : vector<16x1xf32> to vector<16x128xf32>
    %153 = arith.subf %136, %152 : vector<16x128xf32>
    %cst_63 = arith.constant 9.99999996E-13 : f32
    %154 = vector.broadcast %cst_63 : f32 to vector<16x1xf32>
    %155 = arith.addf %151, %154 : vector<16x1xf32>
    %156 = math.rsqrt %155 : vector<16x1xf32>
    %157 = vector.broadcast %156 : vector<16x1xf32> to vector<16x128xf32>
    %158 = arith.mulf %153, %157 : vector<16x128xf32>
    %159 = vector.broadcast %138 : vector<1x128xf32> to vector<16x128xf32>
    %160 = arith.mulf %158, %159 : vector<16x128xf32>
    %161 = vector.broadcast %140 : vector<1x128xf32> to vector<16x128xf32>
    %162 = arith.addf %160, %161 : vector<16x128xf32>
    %163 = vector.shape_cast %162 : vector<16x128xf32> to vector<2x8x128xf32>
    %c0_64 = arith.constant 0 : index
    %c0_65 = arith.constant 0 : index
    %c0_66 = arith.constant 0 : index
    %164 = vector.load %arg17[%c0_64, %c0_65, %c0_66] : memref<2x8x128xf32, #tpu.memory_space<vmem>>, vector<2x8x128xf32>
    tpu.vector_store %arg17[%c0_64, %c0_65, %c0_66], %163 {strides = array<i32>} : memref<2x8x128xf32, #tpu.memory_space<vmem>>, vector<2x8x128xf32>,
    %c1_i32 = arith.constant 1 : i32
    %165 = arith.cmpi eq, %arg1, %c1_i32 : i32
    %166 = arith.extui %165 : i1 to i32
    %c0_i32_67 = arith.constant 0 : i32
    %167 = arith.cmpi ne, %166, %c0_i32_67 : i32
    scf.if %167 {
      %168 = vector.extract_strided_slice %163 {offsets = [0, 0, 0], sizes = [2, 1, 128], strides = [1, 1, 1]} : vector<2x8x128xf32> to vector<2x1x128xf32>
      %169 = vector.shape_cast %168 : vector<2x1x128xf32> to vector<2x128xf32>
      %c0_68 = arith.constant 0 : index
      %c0_69 = arith.constant 0 : index
      %170 = vector.load %arg16[%c0_68, %c0_69] : memref<2x128xf32, #tpu.memory_space<vmem>>, vector<2x128xf32>
      tpu.vector_store %arg16[%c0_68, %c0_69], %169 {strides = array<i32>} : memref<2x128xf32, #tpu.memory_space<vmem>>, vector<2x128xf32>,
    } else {
    }
    return
  }
  func.func @transform_0(%arg0: i32, %arg1: i32) -> (i32, i32, i32) {
    %c0_i32 = arith.constant 0 : i32
    %c0_i32_0 = arith.constant 0 : i32
    %c0_i32_1 = arith.constant 0 : i32
    return %arg0, %c0_i32, %c0_i32_0 : i32, i32, i32
  }
  func.func @transform_1(%arg0: i32, %arg1: i32) -> (i32, i32, i32) {
    %c0_i32 = arith.constant 0 : i32
    %c0_i32_0 = arith.constant 0 : i32
    %c0_i32_1 = arith.constant 0 : i32
    return %arg0, %c0_i32, %c0_i32_0 : i32, i32, i32
  }
  func.func @transform_2(%arg0: i32, %arg1: i32) -> (i32, i32, i32) {
    %c0_i32 = arith.constant 0 : i32
    %c0_i32_0 = arith.constant 0 : i32
    %c0_i32_1 = arith.constant 0 : i32
    return %arg1, %c0_i32, %c0_i32_0 : i32, i32, i32
  }
  func.func @transform_3(%arg0: i32, %arg1: i32) -> (i32, i32, i32) {
    %c0_i32 = arith.constant 0 : i32
    %c0_i32_0 = arith.constant 0 : i32
    %c0_i32_1 = arith.constant 0 : i32
    return %arg1, %c0_i32, %c0_i32_0 : i32, i32, i32
  }
  func.func @transform_4(%arg0: i32, %arg1: i32) -> (i32, i32, i32) {
    %c0_i32 = arith.constant 0 : i32
    %c0_i32_0 = arith.constant 0 : i32
    %c0_i32_1 = arith.constant 0 : i32
    return %arg1, %c0_i32, %c0_i32_0 : i32, i32, i32
  }
  func.func @transform_5(%arg0: i32, %arg1: i32) -> (i32, i32, i32) {
    %c0_i32 = arith.constant 0 : i32
    %c0_i32_0 = arith.constant 0 : i32
    %c0_i32_1 = arith.constant 0 : i32
    return %arg1, %c0_i32, %c0_i32_0 : i32, i32, i32
  }
  func.func @transform_6(%arg0: i32, %arg1: i32) -> (i32, i32, i32) {
    %c0_i32 = arith.constant 0 : i32
    %c0_i32_0 = arith.constant 0 : i32
    %c0_i32_1 = arith.constant 0 : i32
    return %arg1, %c0_i32, %c0_i32_0 : i32, i32, i32
  }
  func.func @transform_7(%arg0: i32, %arg1: i32) -> (i32, i32, i32) {
    %c0_i32 = arith.constant 0 : i32
    %c0_i32_0 = arith.constant 0 : i32
    %c0_i32_1 = arith.constant 0 : i32
    return %arg1, %c0_i32, %c0_i32_0 : i32, i32, i32
  }
  func.func @transform_8(%arg0: i32, %arg1: i32) -> (i32, i32, i32) {
    %c0_i32 = arith.constant 0 : i32
    %c0_i32_0 = arith.constant 0 : i32
    %c0_i32_1 = arith.constant 0 : i32
    return %arg1, %c0_i32, %c0_i32_0 : i32, i32, i32
  }
  func.func @transform_9(%arg0: i32, %arg1: i32) -> (i32, i32, i32) {
    %c0_i32 = arith.constant 0 : i32
    %c0_i32_0 = arith.constant 0 : i32
    %c0_i32_1 = arith.constant 0 : i32
    return %arg1, %c0_i32, %c0_i32_0 : i32, i32, i32
  }
  func.func @transform_10(%arg0: i32, %arg1: i32) -> (i32, i32, i32) {
    %c0_i32 = arith.constant 0 : i32
    %c0_i32_0 = arith.constant 0 : i32
    %c0_i32_1 = arith.constant 0 : i32
    return %arg1, %c0_i32, %c0_i32_0 : i32, i32, i32
  }
  func.func @transform_11(%arg0: i32, %arg1: i32) -> (i32, i32, i32) {
    %c0_i32 = arith.constant 0 : i32
    %c0_i32_0 = arith.constant 0 : i32
    %c0_i32_1 = arith.constant 0 : i32
    return %arg1, %c0_i32, %c0_i32_0 : i32, i32, i32
  }
  func.func @transform_12(%arg0: i32, %arg1: i32) -> (i32, i32, i32) {
    %c0_i32 = arith.constant 0 : i32
    %c0_i32_0 = arith.constant 0 : i32
    %c0_i32_1 = arith.constant 0 : i32
    return %arg1, %c0_i32, %c0_i32_0 : i32, i32, i32
  }
  func.func @transform_13(%arg0: i32, %arg1: i32) -> (i32, i32, i32) {
    %c0_i32 = arith.constant 0 : i32
    %c0_i32_0 = arith.constant 0 : i32
    %c0_i32_1 = arith.constant 0 : i32
    return %arg1, %c0_i32, %c0_i32_0 : i32, i32, i32
  }
  func.func @transform_14(%arg0: i32, %arg1: i32) -> (i32, i32) {
    %c0_i32 = arith.constant 0 : i32
    %c0_i32_0 = arith.constant 0 : i32
    return %arg0, %c0_i32 : i32, i32
  }
}

</mosaic_0001>

<llo_original>
// kernel: forward.1
$region0: #{forward.1}
  #allocation0 [shape = 'u32[]', space=smem, size = 0x4, offset = 0x4, fixed_abs, tag = 'smem constant byte address 0x4 - core index']
  #allocation1 [shape = 'u32[144,128]{1,0:T(1,128)}', space=vmem, size = 0x12000, scoped, tag = 'internal scratch']
  #allocation2 [shape = 'f32[2,8,128]{2,1,0:T(8,128)}', space=vmem, size = 0x2000, scoped, tag = 'scratch operand']
  %s0 = inlined_call_operand.vmem [shape: f32[2,8,128], index: 0, kind: input, shape index: {}]
  %s1 = inlined_call_operand.vmem [shape: f32[2,1,8], index: 1, kind: input, shape index: {}]
  %s2 = inlined_call_operand.hbm [shape: bf16[2,128,384], index: 2, kind: input, shape index: {}]
  %s3 = inlined_call_operand.vmem [shape: f32[2,1,384], index: 3, kind: input, shape index: {}]
  %s4 = inlined_call_operand.hbm [shape: bf16[2,128,128], index: 4, kind: input, shape index: {}]
  %s5 = inlined_call_operand.vmem [shape: f32[2,1,128], index: 5, kind: input, shape index: {}]
  %s6 = inlined_call_operand.vmem [shape: f32[2,1,128], index: 6, kind: input, shape index: {}]
  %s7 = inlined_call_operand.vmem [shape: f32[2,1,128], index: 7, kind: input, shape index: {}]
  %s8 = inlined_call_operand.vmem [shape: bf16[2,128,256], index: 8, kind: input, shape index: {}]
  %s9 = inlined_call_operand.vmem [shape: f32[2,1,256], index: 9, kind: input, shape index: {}]
  %s10 = inlined_call_operand.hbm [shape: bf16[2,256,128], index: 10, kind: input, shape index: {}]
  %s11 = inlined_call_operand.vmem [shape: f32[2,1,128], index: 11, kind: input, shape index: {}]
  %s12 = inlined_call_operand.vmem [shape: f32[2,1,128], index: 12, kind: input, shape index: {}]
  %s13 = inlined_call_operand.vmem [shape: f32[2,1,128], index: 13, kind: input, shape index: {}]
  %s14 = inlined_call_operand.vmem [shape: f32[2,128], index: 14, kind: output, shape index: {}]
  %s15 = sld [smem:[#allocation0]]
  $region109: #{forward.1} parent=0
    _
  %s17 = ssub.s32 1, %s15
  %s18 = scalar_select 0, %s17, %s15
  $region1: #{forward.1} parent=0
    #allocation3 [shape = 'u8[196608]{0}', space=vmem, size = 0x30000, scoped, tag = 'input window, operand 2']
    #allocation4 [shape = 's32[2]{0}', space=sflag, size = 0x8, scoped, tag = 'scoped memory for forward.1']
    #allocation5 [shape = 'u8[65536]{0}', space=vmem, size = 0x10000, scoped, tag = 'input window, operand 4']
    #allocation6 [shape = 's32[2]{0}', space=sflag, size = 0x8, scoped, tag = 'scoped memory for forward.1']
    #allocation7 [shape = 'u8[131072]{0}', space=vmem, size = 0x20000, scoped, tag = 'input window, operand 10']
    %19 = vsyncpa [#allocation4], 0
    %s20 = scalar_lea.sflag [#allocation4], 1
    %21 = vsyncpa %s20, 0
    %22 = vsyncpa [#allocation6], 0
    %s23 = scalar_lea.sflag [#allocation6], 1
    %24 = vsyncpa %s23, 0
    loop: start=0, step=1, limit=4
    $region2: #{forward.1} parent=1 // loop_pre_header
      _
    $region3: #{forward.1} parent=1 // loop_header
      %s26 = sphi 0, %s30
      %p27 = scmp.ge.s32.totalorder %s26, 4
      %s33 = sphi 0, %s45
      %s34 = sphi 0, %s41
      %s35 = sphi 0, %s33
      %s36 = sphi 0, %s34
      %s37 = sphi 0, %s35
      %s38 = sphi 0, %s36
      %s48 = sphi 0, %s50
      %s51 = sphi 0, %s48
      %s52 = sphi 0, %s51
      %s68 = sphi 0, %s52
      %s74 = sphi 0, %s76
      %s77 = sphi 0, %s74
      %s78 = sphi 0, %s77
      %s94 = sphi 0, %s78
      %s100 = sphi 0, %s102
      %s103 = sphi 0, %s100
      %s104 = sphi 0, %s103
      %s120 = sphi 0, %s104
      %s126 = sphi 0, %s128
      %s129 = sphi 0, %s126
      %s130 = sphi 0, %s129
      %s146 = sphi 0, %s130
      %s152 = sphi 0, %s154
      %s155 = sphi 0, %s152
      %s156 = sphi 0, %s155
      %s172 = sphi 0, %s156
      %s178 = sphi 0, %s180
      %s181 = sphi 0, %s178
      %s182 = sphi 0, %s181
      %s198 = sphi 0, %s182
      %s204 = sphi 0, %s206
      %s207 = sphi 0, %s204
      %s208 = sphi 0, %s207
      %s224 = sphi 0, %s208
      %s230 = sphi 0, %s232
      %s233 = sphi 0, %s230
      %s234 = sphi 0, %s233
      %s250 = sphi 0, %s234
      %s256 = sphi 0, %s258
      %s259 = sphi 0, %s256
      %s260 = sphi 0, %s259
      %s276 = sphi 0, %s260
      %s282 = sphi 0, %s284
      %s285 = sphi 0, %s282
      %s286 = sphi 0, %s285
      %s302 = sphi 0, %s286
      %s308 = sphi 0, %s310
      %s311 = sphi 0, %s308
      %s312 = sphi 0, %s311
      %s328 = sphi 0, %s312
      %s334 = sphi 0, %s336
      %s337 = sphi 0, %s334
      %s338 = sphi 0, %s337
      %s354 = sphi 0, %s338
      %s360 = sphi 0, %s362
      %s363 = sphi 0, %s360
      %s364 = sphi 0, %s363
      %s380 = sphi 0, %s364
      %s386 = sphi 0, %s388
      %s389 = sphi 0, %s386
      %s390 = sphi 0, %s389
      %s406 = sphi 0, %s390
      %s412 = sphi 0, %s414
      %s415 = sphi 0, %s412
      %s416 = sphi 0, %s415
      %s432 = sphi 0, %s416
    $region4: #{forward.1} parent=1 // loop_header_branch
      %29 = sbr.rel (%p27) target = $region8
    $region5: #{forward.1} parent=1 // loop_body
      %s31 = ssub.s32 %s26, 1
      %s32 = ssub.s32 %s26, 2
      %s39 = sadd.s32 1, %s34
      %p40 = scmp.ge.s32.totalorder %s39, 2
      %s41 = scalar_select %p40, 0, %s39
      %s42 = sadd.s32 1, %s33
      %s43 = scalar_select %p40, %s42, %s33
      %p44 = scmp.ge.s32.totalorder %s43, 1
      %s45 = scalar_select %p44, 0, %s43
      %s46 = ssub.s32 %s33, %s45
      %p47 = scmp.eq.s32.totalorder %s46, 0
      %s49 = sadd.s32 %s48, 1
      %s50 = scalar_select %p47, %s48, %s49
      %p53 = pneg %p47
      %p54 = scmp.eq.s32.totalorder %s26, 1
      %p55 = por %p53, %p54
      %p56 = scmp.ne.s32.totalorder %s48, %s51
      %p57 = scmp.eq.s32.totalorder %s26, 0
      %p58 = por %p56, %p57
      %p59 = scmp.ne.s32.totalorder %s48, %s51
      %p60 = scmp.eq.s32.totalorder %s31, 1
      %p61 = por %p59, %p60
      %p62 = scmp.ne.s32.totalorder %s51, %s52
      %p63 = scmp.eq.s32.totalorder %s31, 0
      %p64 = por %p62, %p63
      %p65 = scmp.ne.s32.totalorder %s51, %s52
      %p66 = scmp.eq.s32.totalorder %s32, 1
      %p67 = por %p65, %p66
      %p69 = scmp.ne.s32.totalorder %s52, %s68
      %p70 = scmp.eq.s32.totalorder %s32, 0
      %p71 = por %p69, %p70
      %s72 = ssub.s32 %s33, %s45
      %p73 = scmp.eq.s32.totalorder %s72, 0
      %s75 = sadd.s32 %s74, 1
      %s76 = scalar_select %p73, %s74, %s75
      %p79 = pneg %p73
      %p80 = scmp.eq.s32.totalorder %s26, 1
      %p81 = por %p79, %p80
      %p82 = scmp.ne.s32.totalorder %s74, %s77
      %p83 = scmp.eq.s32.totalorder %s26, 0
      %p84 = por %p82, %p83
      %p85 = scmp.ne.s32.totalorder %s74, %s77
      %p86 = scmp.eq.s32.totalorder %s31, 1
      %p87 = por %p85, %p86
      %p88 = scmp.ne.s32.totalorder %s77, %s78
      %p89 = scmp.eq.s32.totalorder %s31, 0
      %p90 = por %p88, %p89
      %p91 = scmp.ne.s32.totalorder %s77, %s78
      %p92 = scmp.eq.s32.totalorder %s32, 1
      %p93 = por %p91, %p92
      %p95 = scmp.ne.s32.totalorder %s78, %s94
      %p96 = scmp.eq.s32.totalorder %s32, 0
      %p97 = por %p95, %p96
      %s98 = ssub.s32 %s34, %s41
      %p99 = scmp.eq.s32.totalorder %s98, 0
      %s101 = sadd.s32 %s100, 1
      %s102 = scalar_select %p99, %s100, %s101
      %p105 = pneg %p99
      %p106 = scmp.eq.s32.totalorder %s26, 1
      %p107 = por %p105, %p106
      %p108 = scmp.ne.s32.totalorder %s100, %s103
      %p109 = scmp.eq.s32.totalorder %s26, 0
      %p110 = por %p108, %p109
      %p111 = scmp.ne.s32.totalorder %s100, %s103
      %p112 = scmp.eq.s32.totalorder %s31, 1
      %p113 = por %p111, %p112
      %p114 = scmp.ne.s32.totalorder %s103, %s104
      %p115 = scmp.eq.s32.totalorder %s31, 0
      %p116 = por %p114, %p115
      %p117 = scmp.ne.s32.totalorder %s103, %s104
      %p118 = scmp.eq.s32.totalorder %s32, 1
      %p119 = por %p117, %p118
      %p121 = scmp.ne.s32.totalorder %s104, %s120
      %p122 = scmp.eq.s32.totalorder %s32, 0
      %p123 = por %p121, %p122
      %s124 = ssub.s32 %s34, %s41
      %p125 = scmp.eq.s32.totalorder %s124, 0
      %s127 = sadd.s32 %s126, 1
      %s128 = scalar_select %p125, %s126, %s127
      %p131 = pneg %p125
      %p132 = scmp.eq.s32.totalorder %s26, 1
      %p133 = por %p131, %p132
      %p134 = scmp.ne.s32.totalorder %s126, %s129
      %p135 = scmp.eq.s32.totalorder %s26, 0
      %p136 = por %p134, %p135
      %p137 = scmp.ne.s32.totalorder %s126, %s129
      %p138 = scmp.eq.s32.totalorder %s31, 1
      %p139 = por %p137, %p138
      %p140 = scmp.ne.s32.totalorder %s129, %s130
      %p141 = scmp.eq.s32.totalorder %s31, 0
      %p142 = por %p140, %p141
      %p143 = scmp.ne.s32.totalorder %s129, %s130
      %p144 = scmp.eq.s32.totalorder %s32, 1
      %p145 = por %p143, %p144
      %p147 = scmp.ne.s32.totalorder %s130, %s146
      %p148 = scmp.eq.s32.totalorder %s32, 0
      %p149 = por %p147, %p148
      %s150 = ssub.s32 %s34, %s41
      %p151 = scmp.eq.s32.totalorder %s150, 0
      %s153 = sadd.s32 %s152, 1
      %s154 = scalar_select %p151, %s152, %s153
      %p157 = pneg %p151
      %p158 = scmp.eq.s32.totalorder %s26, 1
      %p159 = por %p157, %p158
      %p160 = scmp.ne.s32.totalorder %s152, %s155
      %p161 = scmp.eq.s32.totalorder %s26, 0
      %p162 = por %p160, %p161
      %p163 = scmp.ne.s32.totalorder %s152, %s155
      %p164 = scmp.eq.s32.totalorder %s31, 1
      %p165 = por %p163, %p164
      %p166 = scmp.ne.s32.totalorder %s155, %s156
      %p167 = scmp.eq.s32.totalorder %s31, 0
      %p168 = por %p166, %p167
      %p169 = scmp.ne.s32.totalorder %s155, %s156
      %p170 = scmp.eq.s32.totalorder %s32, 1
      %p171 = por %p169, %p170
      %p173 = scmp.ne.s32.totalorder %s156, %s172
      %p174 = scmp.eq.s32.totalorder %s32, 0
      %p175 = por %p173, %p174
      %s176 = ssub.s32 %s34, %s41
      %p177 = scmp.eq.s32.totalorder %s176, 0
      %s179 = sadd.s32 %s178, 1
      %s180 = scalar_select %p177, %s178, %s179
      %p183 = pneg %p177
      %p184 = scmp.eq.s32.totalorder %s26, 1
      %p185 = por %p183, %p184
      %p186 = scmp.ne.s32.totalorder %s178, %s181
      %p187 = scmp.eq.s32.totalorder %s26, 0
      %p188 = por %p186, %p187
      %p189 = scmp.ne.s32.totalorder %s178, %s181
      %p190 = scmp.eq.s32.totalorder %s31, 1
      %p191 = por %p189, %p190
      %p192 = scmp.ne.s32.totalorder %s181, %s182
      %p193 = scmp.eq.s32.totalorder %s31, 0
      %p194 = por %p192, %p193
      %p195 = scmp.ne.s32.totalorder %s181, %s182
      %p196 = scmp.eq.s32.totalorder %s32, 1
      %p197 = por %p195, %p196
      %p199 = scmp.ne.s32.totalorder %s182, %s198
      %p200 = scmp.eq.s32.totalorder %s32, 0
      %p201 = por %p199, %p200
      %s202 = ssub.s32 %s34, %s41
      %p203 = scmp.eq.s32.totalorder %s202, 0
      %s205 = sadd.s32 %s204, 1
      %s206 = scalar_select %p203, %s204, %s205
      %p209 = pneg %p203
      %p210 = scmp.eq.s32.totalorder %s26, 1
      %p211 = por %p209, %p210
      %p212 = scmp.ne.s32.totalorder %s204, %s207
      %p213 = scmp.eq.s32.totalorder %s26, 0
      %p214 = por %p212, %p213
      %p215 = scmp.ne.s32.totalorder %s204, %s207
      %p216 = scmp.eq.s32.totalorder %s31, 1
      %p217 = por %p215, %p216
      %p218 = scmp.ne.s32.totalorder %s207, %s208
      %p219 = scmp.eq.s32.totalorder %s31, 0
      %p220 = por %p218, %p219
      %p221 = scmp.ne.s32.totalorder %s207, %s208
      %p222 = scmp.eq.s32.totalorder %s32, 1
      %p223 = por %p221, %p222
      %p225 = scmp.ne.s32.totalorder %s208, %s224
      %p226 = scmp.eq.s32.totalorder %s32, 0
      %p227 = por %p225, %p226
      %s228 = ssub.s32 %s34, %s41
      %p229 = scmp.eq.s32.totalorder %s228, 0
      %s231 = sadd.s32 %s230, 1
      %s232 = scalar_select %p229, %s230, %s231
      %p235 = pneg %p229
      %p236 = scmp.eq.s32.totalorder %s26, 1
      %p237 = por %p235, %p236
      %p238 = scmp.ne.s32.totalorder %s230, %s233
      %p239 = scmp.eq.s32.totalorder %s26, 0
      %p240 = por %p238, %p239
      %p241 = scmp.ne.s32.totalorder %s230, %s233
      %p242 = scmp.eq.s32.totalorder %s31, 1
      %p243 = por %p241, %p242
      %p244 = scmp.ne.s32.totalorder %s233, %s234
      %p245 = scmp.eq.s32.totalorder %s31, 0
      %p246 = por %p244, %p245
      %p247 = scmp.ne.s32.totalorder %s233, %s234
      %p248 = scmp.eq.s32.totalorder %s32, 1
      %p249 = por %p247, %p248
      %p251 = scmp.ne.s32.totalorder %s234, %s250
      %p252 = scmp.eq.s32.totalorder %s32, 0
      %p253 = por %p251, %p252
      %s254 = ssub.s32 %s34, %s41
      %p255 = scmp.eq.s32.totalorder %s254, 0
      %s257 = sadd.s32 %s256, 1
      %s258 = scalar_select %p255, %s256, %s257
      %p261 = pneg %p255
      %p262 = scmp.eq.s32.totalorder %s26, 1
      %p263 = por %p261, %p262
      %p264 = scmp.ne.s32.totalorder %s256, %s259
      %p265 = scmp.eq.s32.totalorder %s26, 0
      %p266 = por %p264, %p265
      %p267 = scmp.ne.s32.totalorder %s256, %s259
      %p268 = scmp.eq.s32.totalorder %s31, 1
      %p269 = por %p267, %p268
      %p270 = scmp.ne.s32.totalorder %s259, %s260
      %p271 = scmp.eq.s32.totalorder %s31, 0
      %p272 = por %p270, %p271
      %p273 = scmp.ne.s32.totalorder %s259, %s260
      %p274 = scmp.eq.s32.totalorder %s32, 1
      %p275 = por %p273, %p274
      %p277 = scmp.ne.s32.totalorder %s260, %s276
      %p278 = scmp.eq.s32.totalorder %s32, 0
      %p279 = por %p277, %p278
      %s280 = ssub.s32 %s34, %s41
      %p281 = scmp.eq.s32.totalorder %s280, 0
      %s283 = sadd.s32 %s282, 1
      %s284 = scalar_select %p281, %s282, %s283
      %p287 = pneg %p281
      %p288 = scmp.eq.s32.totalorder %s26, 1
      %p289 = por %p287, %p288
      %p290 = scmp.ne.s32.totalorder %s282, %s285
      %p291 = scmp.eq.s32.totalorder %s26, 0
      %p292 = por %p290, %p291
      %p293 = scmp.ne.s32.totalorder %s282, %s285
      %p294 = scmp.eq.s32.totalorder %s31, 1
      %p295 = por %p293, %p294
      %p296 = scmp.ne.s32.totalorder %s285, %s286
      %p297 = scmp.eq.s32.totalorder %s31, 0
      %p298 = por %p296, %p297
      %p299 = scmp.ne.s32.totalorder %s285, %s286
      %p300 = scmp.eq.s32.totalorder %s32, 1
      %p301 = por %p299, %p300
      %p303 = scmp.ne.s32.totalorder %s286, %s302
      %p304 = scmp.eq.s32.totalorder %s32, 0
      %p305 = por %p303, %p304
      %s306 = ssub.s32 %s34, %s41
      %p307 = scmp.eq.s32.totalorder %s306, 0
      %s309 = sadd.s32 %s308, 1
      %s310 = scalar_select %p307, %s308, %s309
      %p313 = pneg %p307
      %p314 = scmp.eq.s32.totalorder %s26, 1
      %p315 = por %p313, %p314
      %p316 = scmp.ne.s32.totalorder %s308, %s311
      %p317 = scmp.eq.s32.totalorder %s26, 0
      %p318 = por %p316, %p317
      %p319 = scmp.ne.s32.totalorder %s308, %s311
      %p320 = scmp.eq.s32.totalorder %s31, 1
      %p321 = por %p319, %p320
      %p322 = scmp.ne.s32.totalorder %s311, %s312
      %p323 = scmp.eq.s32.totalorder %s31, 0
      %p324 = por %p322, %p323
      %p325 = scmp.ne.s32.totalorder %s311, %s312
      %p326 = scmp.eq.s32.totalorder %s32, 1
      %p327 = por %p325, %p326
      %p329 = scmp.ne.s32.totalorder %s312, %s328
      %p330 = scmp.eq.s32.totalorder %s32, 0
      %p331 = por %p329, %p330
      %s332 = ssub.s32 %s34, %s41
      %p333 = scmp.eq.s32.totalorder %s332, 0
      %s335 = sadd.s32 %s334, 1
      %s336 = scalar_select %p333, %s334, %s335
      %p339 = pneg %p333
      %p340 = scmp.eq.s32.totalorder %s26, 1
      %p341 = por %p339, %p340
      %p342 = scmp.ne.s32.totalorder %s334, %s337
      %p343 = scmp.eq.s32.totalorder %s26, 0
      %p344 = por %p342, %p343
      %p345 = scmp.ne.s32.totalorder %s334, %s337
      %p346 = scmp.eq.s32.totalorder %s31, 1
      %p347 = por %p345, %p346
      %p348 = scmp.ne.s32.totalorder %s337, %s338
      %p349 = scmp.eq.s32.totalorder %s31, 0
      %p350 = por %p348, %p349
      %p351 = scmp.ne.s32.totalorder %s337, %s338
      %p352 = scmp.eq.s32.totalorder %s32, 1
      %p353 = por %p351, %p352
      %p355 = scmp.ne.s32.totalorder %s338, %s354
      %p356 = scmp.eq.s32.totalorder %s32, 0
      %p357 = por %p355, %p356
      %s358 = ssub.s32 %s34, %s41
      %p359 = scmp.eq.s32.totalorder %s358, 0
      %s361 = sadd.s32 %s360, 1
      %s362 = scalar_select %p359, %s360, %s361
      %p365 = pneg %p359
      %p366 = scmp.eq.s32.totalorder %s26, 1
      %p367 = por %p365, %p366
      %p368 = scmp.ne.s32.totalorder %s360, %s363
      %p369 = scmp.eq.s32.totalorder %s26, 0
      %p370 = por %p368, %p369
      %p371 = scmp.ne.s32.totalorder %s360, %s363
      %p372 = scmp.eq.s32.totalorder %s31, 1
      %p373 = por %p371, %p372
      %p374 = scmp.ne.s32.totalorder %s363, %s364
      %p375 = scmp.eq.s32.totalorder %s31, 0
      %p376 = por %p374, %p375
      %p377 = scmp.ne.s32.totalorder %s363, %s364
      %p378 = scmp.eq.s32.totalorder %s32, 1
      %p379 = por %p377, %p378
      %p381 = scmp.ne.s32.totalorder %s364, %s380
      %p382 = scmp.eq.s32.totalorder %s32, 0
      %p383 = por %p381, %p382
      %s384 = ssub.s32 %s34, %s41
      %p385 = scmp.eq.s32.totalorder %s384, 0
      %s387 = sadd.s32 %s386, 1
      %s388 = scalar_select %p385, %s386, %s387
      %p391 = pneg %p385
      %p392 = scmp.eq.s32.totalorder %s26, 1
      %p393 = por %p391, %p392
      %p394 = scmp.ne.s32.totalorder %s386, %s389
      %p395 = scmp.eq.s32.totalorder %s26, 0
      %p396 = por %p394, %p395
      %p397 = scmp.ne.s32.totalorder %s386, %s389
      %p398 = scmp.eq.s32.totalorder %s31, 1
      %p399 = por %p397, %p398
      %p400 = scmp.ne.s32.totalorder %s389, %s390
      %p401 = scmp.eq.s32.totalorder %s31, 0
      %p402 = por %p400, %p401
      %p403 = scmp.ne.s32.totalorder %s389, %s390
      %p404 = scmp.eq.s32.totalorder %s32, 1
      %p405 = por %p403, %p404
      %p407 = scmp.ne.s32.totalorder %s390, %s406
      %p408 = scmp.eq.s32.totalorder %s32, 0
      %p409 = por %p407, %p408
      %s410 = ssub.s32 %s33, %s45
      %p411 = scmp.eq.s32.totalorder %s410, 0
      %s413 = sadd.s32 %s412, 1
      %s414 = scalar_select %p411, %s412, %s413
      %p417 = pneg %p411
      %p418 = scmp.eq.s32.totalorder %s26, 1
      %p419 = por %p417, %p418
      %p420 = scmp.ne.s32.totalorder %s412, %s415
      %p421 = scmp.eq.s32.totalorder %s26, 0
      %p422 = por %p420, %p421
      %p423 = scmp.ne.s32.totalorder %s412, %s415
      %p424 = scmp.eq.s32.totalorder %s31, 1
      %p425 = por %p423, %p424
      %p426 = scmp.ne.s32.totalorder %s415, %s416
      %p427 = scmp.eq.s32.totalorder %s31, 0
      %p428 = por %p426, %p427
      %p429 = scmp.ne.s32.totalorder %s415, %s416
      %p430 = scmp.eq.s32.totalorder %s32, 1
      %p431 = por %p429, %p430
      %p433 = scmp.ne.s32.totalorder %s416, %s432
      %p434 = scmp.eq.s32.totalorder %s32, 0
      %p435 = por %p433, %p434
      %p436 = scmp.le.s32.totalorder 1, %s26
      %p437 = scmp.lt.s32.totalorder %s26, 3
      %p438 = pnand %p436, %p437
      %p439 = pneg %p438
      // Predicated region
      $region9: #{forward.1} parent=5 // pred_check
        _
      $region10: #{forward.1} parent=5 // pred_check_branch
        %441 = sbr.rel (%p438) target = $region12
      $region11: #{forward.1} parent=5 // pred_region
        %s442 = ssub.s32 %s26, 1
        // Predicated region
        $region13: #{forward.1} parent=11 // pred_check
          %p443 = pneg %p64
        $region14: #{forward.1} parent=11 // pred_check_branch
          %445 = sbr.rel (%p443) target = $region16
        $region15: #{forward.1} parent=11 // pred_region
          %s446 = smul.u32 2, %s35
          %p447 = scmp.lt.s32.totalorder %s446, 1
          %s448 = scalar_select %p447, %s446, 1
          %s449 = smul.addr %s448, 8
          %s450 = scalar_lea.vmem %s0, %s449
          %s451 = smul.u32 2, %s35
        $region16: #{forward.1} parent=11 // pred_fallthru
          _
        // Predicated region
        $region17: #{forward.1} parent=11 // pred_check
          %p452 = pneg %p90
        $region18: #{forward.1} parent=11 // pred_check_branch
          %454 = sbr.rel (%p452) target = $region20
        $region19: #{forward.1} parent=11 // pred_region
          %s455 = smul.u32 2, %s35
          %p456 = scmp.lt.s32.totalorder %s455, 1
          %s457 = scalar_select %p456, %s455, 1
          %s458 = scalar_lea.vmem %s1, %s457
          %s459 = smul.u32 2, %s35
        $region20: #{forward.1} parent=11 // pred_fallthru
          _
      $region12: #{forward.1} parent=5 // pred_fallthru
        _
      %p460 = scmp.lt.s32.totalorder %s26, 2
      // Predicated region
      $region21: #{forward.1} parent=5 // pred_check
        %p461 = pneg %p460
      $region22: #{forward.1} parent=5 // pred_check_branch
        %463 = sbr.rel (%p461) target = $region24
      $region23: #{forward.1} parent=5 // pred_region
        // Predicated region
        $region25: #{forward.1} parent=23 // pred_check
          %p464 = pneg %p110
        $region26: #{forward.1} parent=23 // pred_check_branch
          %466 = sbr.rel (%p464) target = $region28
        $region27: #{forward.1} parent=23 // pred_region
          %s467 = sand.u32 %s100, 1
          %s468 = scalar_lea.sflag [#allocation4], %s467
          %s469 = sand.u32 %s100, 1
          %s470 = smul.addr %s469, 192
          %s471 = scalar_lea.vmem [#allocation3], %s470
          %s473 = ssub.s32 3072, 3072
          %474 = vsyncadd %s468, %s473
          %s475 = smul.addr %s34, 48
          %s476 = smul.addr %s475, 64
          %s477 = scalar_lea.hbm %s2, %s476
          %s478 = sshll.u32 %s471, 4
          %s479 = int_to_ptr.vmem [resolvable:$true] %s478
          %484 = dma.hbm_to_vmem [thread:$0]  %s477, 3072, %s479, %s468, 192, 192, 12
        $region28: #{forward.1} parent=23 // pred_fallthru
          _
        // Predicated region
        $region29: #{forward.1} parent=23 // pred_check
          %p485 = pneg %p136
        $region30: #{forward.1} parent=23 // pred_check_branch
          %487 = sbr.rel (%p485) target = $region32
        $region31: #{forward.1} parent=23 // pred_region
          %p488 = scmp.lt.s32.totalorder %s34, 1
          %s489 = scalar_select %p488, %s34, 1
          %s490 = smul.addr %s489, 3
          %s491 = scalar_lea.vmem %s3, %s490
        $region32: #{forward.1} parent=23 // pred_fallthru
          _
        // Predicated region
        $region33: #{forward.1} parent=23 // pred_check
          %p492 = pneg %p162
        $region34: #{forward.1} parent=23 // pred_check_branch
          %494 = sbr.rel (%p492) target = $region36
        $region35: #{forward.1} parent=23 // pred_region
          %s495 = sand.u32 %s26, 1
          %s496 = scalar_lea.sflag [#allocation6], %s495
          %s497 = sand.u32 %s152, 1
          %s498 = smul.addr %s497, 64
          %s499 = scalar_lea.vmem [#allocation5], %s498
          %s501 = ssub.s32 1024, 1024
          %502 = vsyncadd %s496, %s501
          %s503 = smul.addr %s34, 16
          %s504 = smul.addr %s503, 64
          %s505 = scalar_lea.hbm %s4, %s504
          %s506 = sshll.u32 %s499, 4
          %s507 = int_to_ptr.vmem [resolvable:$true] %s506
          %512 = dma.hbm_to_vmem [thread:$0]  %s505, 1024, %s507, %s496, 64, 64, 4
        $region36: #{forward.1} parent=23 // pred_fallthru
          _
        // Predicated region
        $region37: #{forward.1} parent=23 // pred_check
          %p513 = pneg %p188
        $region38: #{forward.1} parent=23 // pred_check_branch
          %515 = sbr.rel (%p513) target = $region40
        $region39: #{forward.1} parent=23 // pred_region
          %p516 = scmp.lt.s32.totalorder %s34, 1
          %s517 = scalar_select %p516, %s34, 1
          %s518 = scalar_lea.vmem %s5, %s517
        $region40: #{forward.1} parent=23 // pred_fallthru
          _
        // Predicated region
        $region41: #{forward.1} parent=23 // pred_check
          %p519 = pneg %p214
        $region42: #{forward.1} parent=23 // pred_check_branch
          %521 = sbr.rel (%p519) target = $region44
        $region43: #{forward.1} parent=23 // pred_region
          %p522 = scmp.lt.s32.totalorder %s34, 1
          %s523 = scalar_select %p522, %s34, 1
          %s524 = scalar_lea.vmem %s6, %s523
        $region44: #{forward.1} parent=23 // pred_fallthru
          _
        // Predicated region
        $region45: #{forward.1} parent=23 // pred_check
          %p525 = pneg %p240
        $region46: #{forward.1} parent=23 // pred_check_branch
          %527 = sbr.rel (%p525) target = $region48
        $region47: #{forward.1} parent=23 // pred_region
          %p528 = scmp.lt.s32.totalorder %s34, 1
          %s529 = scalar_select %p528, %s34, 1
          %s530 = scalar_lea.vmem %s7, %s529
        $region48: #{forward.1} parent=23 // pred_fallthru
          _
        // Predicated region
        $region49: #{forward.1} parent=23 // pred_check
          %p531 = pneg %p266
        $region50: #{forward.1} parent=23 // pred_check_branch
          %533 = sbr.rel (%p531) target = $region52
        $region51: #{forward.1} parent=23 // pred_region
          %p534 = scmp.lt.s32.totalorder %s34, 1
          %s535 = scalar_select %p534, %s34, 1
          %s536 = smul.addr %s535, 32
          %s537 = smul.addr %s536, 4
          %s538 = scalar_lea.vmem %s8, %s537
        $region52: #{forward.1} parent=23 // pred_fallthru
          _
        // Predicated region
        $region53: #{forward.1} parent=23 // pred_check
          %p539 = pneg %p292
        $region54: #{forward.1} parent=23 // pred_check_branch
          %541 = sbr.rel (%p539) target = $region56
        $region55: #{forward.1} parent=23 // pred_region
          %p542 = scmp.lt.s32.totalorder %s34, 1
          %s543 = scalar_select %p542, %s34, 1
          %s544 = smul.addr %s543, 2
          %s545 = scalar_lea.vmem %s9, %s544
        $region56: #{forward.1} parent=23 // pred_fallthru
          _
        // Predicated region
        $region57: #{forward.1} parent=23 // pred_check
          %p546 = pneg %p318
        $region58: #{forward.1} parent=23 // pred_check_branch
          %548 = sbr.rel (%p546) target = $region60
        $region59: #{forward.1} parent=23 // pred_region
          %s549 = sand.u32 %s26, 1
          %s550 = scalar_lea.sflag [#allocation6], %s549
          %s551 = sand.u32 %s308, 1
          %s552 = smul.addr %s551, 128
          %s553 = scalar_lea.vmem [#allocation7], %s552
          %s555 = ssub.s32 2048, 2048
          %556 = vsyncadd %s550, %s555
          %s557 = smul.addr %s34, 32
          %s558 = smul.addr %s557, 64
          %s559 = scalar_lea.hbm %s10, %s558
          %s560 = sshll.u32 %s553, 4
          %s561 = int_to_ptr.vmem [resolvable:$true] %s560
          %566 = dma.hbm_to_vmem [thread:$0]  %s559, 2048, %s561, %s550, 64, 64, 4
        $region60: #{forward.1} parent=23 // pred_fallthru
          _
        // Predicated region
        $region61: #{forward.1} parent=23 // pred_check
          %p567 = pneg %p344
        $region62: #{forward.1} parent=23 // pred_check_branch
          %569 = sbr.rel (%p567) target = $region64
        $region63: #{forward.1} parent=23 // pred_region
          %p570 = scmp.lt.s32.totalorder %s34, 1
          %s571 = scalar_select %p570, %s34, 1
          %s572 = scalar_lea.vmem %s11, %s571
        $region64: #{forward.1} parent=23 // pred_fallthru
          _
        // Predicated region
        $region65: #{forward.1} parent=23 // pred_check
          %p573 = pneg %p370
        $region66: #{forward.1} parent=23 // pred_check_branch
          %575 = sbr.rel (%p573) target = $region68
        $region67: #{forward.1} parent=23 // pred_region
          %p576 = scmp.lt.s32.totalorder %s34, 1
          %s577 = scalar_select %p576, %s34, 1
          %s578 = scalar_lea.vmem %s12, %s577
        $region68: #{forward.1} parent=23 // pred_fallthru
          _
        // Predicated region
        $region69: #{forward.1} parent=23 // pred_check
          %p579 = pneg %p396
        $region70: #{forward.1} parent=23 // pred_check_branch
          %581 = sbr.rel (%p579) target = $region72
        $region71: #{forward.1} parent=23 // pred_region
          %p582 = scmp.lt.s32.totalorder %s34, 1
          %s583 = scalar_select %p582, %s34, 1
          %s584 = scalar_lea.vmem %s13, %s583
        $region72: #{forward.1} parent=23 // pred_fallthru
          _
      $region24: #{forward.1} parent=5 // pred_fallthru
        _
      %p585 = scmp.le.s32.totalorder 1, %s26
      %p586 = scmp.lt.s32.totalorder %s26, 3
      %p587 = pnand %p585, %p586
      %p588 = pneg %p587
      // Predicated region
      $region73: #{forward.1} parent=5 // pred_check
        _
      $region74: #{forward.1} parent=5 // pred_check_branch
        %590 = sbr.rel (%p587) target = $region76
      $region75: #{forward.1} parent=5 // pred_region
        %s591 = ssub.s32 %s26, 1
        %s592 = sand.u32 %s103, 1
        %s593 = scalar_lea.sflag [#allocation4], %s592
        %s594 = sand.u32 %s103, 1
        %s595 = smul.addr %s594, 192
        %s596 = scalar_lea.vmem [#allocation3], %s595
        // Predicated region
        $region77: #{forward.1} parent=75 // pred_check
          %p597 = pneg %p116
        $region78: #{forward.1} parent=75 // pred_check_branch
          %599 = sbr.rel (%p597) target = $region80
        $region79: #{forward.1} parent=75 // pred_region
          %600 = dma.done %s593, 3072
        $region80: #{forward.1} parent=75 // pred_fallthru
          _
        %s601 = sand.u32 %s31, 1
        %s602 = scalar_lea.sflag [#allocation6], %s601
        %s603 = sand.u32 %s155, 1
        %s604 = smul.addr %s603, 64
        %s605 = scalar_lea.vmem [#allocation5], %s604
        // Predicated region
        $region81: #{forward.1} parent=75 // pred_check
          %p606 = pneg %p168
        $region82: #{forward.1} parent=75 // pred_check_branch
          %608 = sbr.rel (%p606) target = $region84
        $region83: #{forward.1} parent=75 // pred_region
          %609 = dma.done %s602, 1024
        $region84: #{forward.1} parent=75 // pred_fallthru
          _
        %s610 = sand.u32 %s31, 1
        %s611 = scalar_lea.sflag [#allocation6], %s610
        %s612 = sand.u32 %s311, 1
        %s613 = smul.addr %s612, 128
        %s614 = scalar_lea.vmem [#allocation7], %s613
        // Predicated region
        $region85: #{forward.1} parent=75 // pred_check
          %p615 = pneg %p324
        $region86: #{forward.1} parent=75 // pred_check_branch
          %617 = sbr.rel (%p615) target = $region88
        $region87: #{forward.1} parent=75 // pred_region
          %618 = dma.done %s611, 2048
        $region88: #{forward.1} parent=75 // pred_fallthru
          _
        %s619 = smul.u32 2, %s35
        %p620 = scmp.lt.s32.totalorder %s619, 1
        %s621 = scalar_select %p620, %s619, 1
        %s622 = smul.addr %s621, 8
        %s623 = scalar_lea.vmem %s0, %s622
        %p624 = pneg %p64
        %p625 = pneg %p61
        %s626 = smul.u32 2, %s35
        %p627 = scmp.lt.s32.totalorder %s626, 1
        %s628 = scalar_select %p627, %s626, 1
        %s629 = scalar_lea.vmem %s1, %s628
        %p630 = pneg %p90
        %p631 = pneg %p87
        %s632 = sand.u32 %s103, 1
        %s633 = scalar_lea.sflag [#allocation4], %s632
        %s634 = sand.u32 %s103, 1
        %s635 = smul.addr %s634, 192
        %s636 = scalar_lea.vmem [#allocation3], %s635
        %p637 = pneg %p116
        %p638 = pneg %p113
        %p639 = scmp.lt.s32.totalorder %s36, 1
        %s640 = scalar_select %p639, %s36, 1
        %s641 = smul.addr %s640, 3
        %s642 = scalar_lea.vmem %s3, %s641
        %p643 = pneg %p142
        %p644 = pneg %p139
        %s645 = sand.u32 %s31, 1
        %s646 = scalar_lea.sflag [#allocation6], %s645
        %s647 = sand.u32 %s155, 1
        %s648 = smul.addr %s647, 64
        %s649 = scalar_lea.vmem [#allocation5], %s648
        %p650 = pneg %p168
        %p651 = pneg %p165
        %p652 = scmp.lt.s32.totalorder %s36, 1
        %s653 = scalar_select %p652, %s36, 1
        %s654 = scalar_lea.vmem %s5, %s653
        %p655 = pneg %p194
        %p656 = pneg %p191
        %p657 = scmp.lt.s32.totalorder %s36, 1
        %s658 = scalar_select %p657, %s36, 1
        %s659 = scalar_lea.vmem %s6, %s658
        %p660 = pneg %p220
        %p661 = pneg %p217
        %p662 = scmp.lt.s32.totalorder %s36, 1
        %s663 = scalar_select %p662, %s36, 1
        %s664 = scalar_lea.vmem %s7, %s663
        %p665 = pneg %p246
        %p666 = pneg %p243
        %p667 = scmp.lt.s32.totalorder %s36, 1
        %s668 = scalar_select %p667, %s36, 1
        %s669 = smul.addr %s668, 32
        %s670 = smul.addr %s669, 4
        %s671 = scalar_lea.vmem %s8, %s670
        %p672 = pneg %p272
        %p673 = pneg %p269
        %p674 = scmp.lt.s32.totalorder %s36, 1
        %s675 = scalar_select %p674, %s36, 1
        %s676 = smul.addr %s675, 2
        %s677 = scalar_lea.vmem %s9, %s676
        %p678 = pneg %p298
        %p679 = pneg %p295
        %s680 = sand.u32 %s31, 1
        %s681 = scalar_lea.sflag [#allocation6], %s680
        %s682 = sand.u32 %s311, 1
        %s683 = smul.addr %s682, 128
        %s684 = scalar_lea.vmem [#allocation7], %s683
        %p685 = pneg %p324
        %p686 = pneg %p321
        %p687 = scmp.lt.s32.totalorder %s36, 1
        %s688 = scalar_select %p687, %s36, 1
        %s689 = scalar_lea.vmem %s11, %s688
        %p690 = pneg %p350
        %p691 = pneg %p347
        %p692 = scmp.lt.s32.totalorder %s36, 1
        %s693 = scalar_select %p692, %s36, 1
        %s694 = scalar_lea.vmem %s12, %s693
        %p695 = pneg %p376
        %p696 = pneg %p373
        %p697 = scmp.lt.s32.totalorder %s36, 1
        %s698 = scalar_select %p697, %s36, 1
        %s699 = scalar_lea.vmem %s13, %s698
        %p700 = pneg %p402
        %p701 = pneg %p399
        %p702 = pneg %p428
        %p703 = pneg %p425
        %p704 = scmp.lt.s32.totalorder %s35, 0
        %s705 = scalar_select %p704, %s35, 0
        %s706 = smul.addr %s705, 2
        %s707 = scalar_lea.vmem %s14, %s706
        %s708 = smul.u32 2, %s35
        %p709 = scmp.lt.s32.totalorder %s708, 1
        %s710 = scalar_select %p709, %s708, 1
        %s711 = smul.addr %s710, 8
        %s712 = scalar_lea.vmem %s0, %s711
        %s713 = smul.u32 2, %s35
        %s714 = smul.u32 2, %s35
        %p715 = scmp.lt.s32.totalorder %s714, 1
        %s716 = scalar_select %p715, %s714, 1
        %s717 = scalar_lea.vmem %s1, %s716
        %s718 = smul.u32 2, %s35
        %p719 = scmp.lt.s32.totalorder %s36, 1
        %s720 = scalar_select %p719, %s36, 1
        %s721 = smul.addr %s720, 3
        %s722 = scalar_lea.vmem %s3, %s721
        %p723 = scmp.lt.s32.totalorder %s36, 1
        %s724 = scalar_select %p723, %s36, 1
        %s725 = scalar_lea.vmem %s5, %s724
        %p726 = scmp.lt.s32.totalorder %s36, 1
        %s727 = scalar_select %p726, %s36, 1
        %s728 = scalar_lea.vmem %s6, %s727
        %p729 = scmp.lt.s32.totalorder %s36, 1
        %s730 = scalar_select %p729, %s36, 1
        %s731 = scalar_lea.vmem %s7, %s730
        %p732 = scmp.lt.s32.totalorder %s36, 1
        %s733 = scalar_select %p732, %s36, 1
        %s734 = smul.addr %s733, 32
        %s735 = smul.addr %s734, 4
        %s736 = scalar_lea.vmem %s8, %s735
        %p737 = scmp.lt.s32.totalorder %s36, 1
        %s738 = scalar_select %p737, %s36, 1
        %s739 = smul.addr %s738, 2
        %s740 = scalar_lea.vmem %s9, %s739
        %p741 = scmp.lt.s32.totalorder %s36, 1
        %s742 = scalar_select %p741, %s36, 1
        %s743 = scalar_lea.vmem %s11, %s742
        %p744 = scmp.lt.s32.totalorder %s36, 1
        %s745 = scalar_select %p744, %s36, 1
        %s746 = scalar_lea.vmem %s12, %s745
        %p747 = scmp.lt.s32.totalorder %s36, 1
        %s748 = scalar_select %p747, %s36, 1
        %s749 = scalar_lea.vmem %s13, %s748
        %p750 = scmp.lt.s32.totalorder %s35, 0
        %s751 = scalar_select %p750, %s35, 0
        %s752 = smul.addr %s751, 2
        %s753 = scalar_lea.vmem %s14, %s752
        %p755 = scmp.eq.s32.totalorder %s36, 0
        // Predicated region
        $region89: #{forward.1} parent=75 // pred_check
          %p756 = pneg %p755
        $region90: #{forward.1} parent=75 // pred_check_branch
          %758 = sbr.rel (%p756) target = $region92
        $region91: #{forward.1} parent=75 // pred_region
          %v759 = vld [vmem:[%s712] sm:$0xff]
          %v760 = vld [vmem:[%s712 + $0x8] sm:$0xff]
          %761 = vst [vmem:[#allocation2] sm:$0xff] %v759
          %762 = vst [vmem:[#allocation2 + $0x8] sm:$0xff] %v760
        $region92: #{forward.1} parent=75 // pred_fallthru
          _
        %v763 = vld [vmem:[#allocation2] sm:$0xff]
        %v764 = vld [vmem:[#allocation2 + $0x8] sm:$0xff]
        %v765 = vpack.c.bf16 %v764, %v763
        %v766 = vld [vmem:[%s596] sm:$0xff]
        %v767 = vld [vmem:[%s596 + $0x8] sm:$0xf]
        %v768 = vld [vmem:[%s596 + $0xc] sm:$0xff]
        %v769 = vld [vmem:[%s596 + $0x14] sm:$0xf]
        %v770 = vld [vmem:[%s596 + $0x18] sm:$0xff]
        %v771 = vld [vmem:[%s596 + $0x20] sm:$0xf]
        %v772 = vld [vmem:[%s596 + $0x24] sm:$0xff]
        %v773 = vld [vmem:[%s596 + $0x2c] sm:$0xf]
        %v774 = vld [vmem:[%s596 + $0x30] sm:$0xff]
        %v775 = vld [vmem:[%s596 + $0x38] sm:$0xf]
        %v776 = vld [vmem:[%s596 + $0x3c] sm:$0xff]
        %v777 = vld [vmem:[%s596 + $0x44] sm:$0xf]
        %v778 = vld [vmem:[%s596 + $0x48] sm:$0xff]
        %v779 = vld [vmem:[%s596 + $0x50] sm:$0xf]
        %v780 = vld [vmem:[%s596 + $0x54] sm:$0xff]
        %v781 = vld [vmem:[%s596 + $0x5c] sm:$0xf]
        %v782 = vld [vmem:[%s596 + $0x60] sm:$0xff]
        %v783 = vld [vmem:[%s596 + $0x68] sm:$0xf]
        %v784 = vld [vmem:[%s596 + $0x6c] sm:$0xff]
        %v785 = vld [vmem:[%s596 + $0x74] sm:$0xf]
        %v786 = vld [vmem:[%s596 + $0x78] sm:$0xff]
        %v787 = vld [vmem:[%s596 + $0x80] sm:$0xf]
        %v788 = vld [vmem:[%s596 + $0x84] sm:$0xff]
        %v789 = vld [vmem:[%s596 + $0x8c] sm:$0xf]
        %v790 = vld [vmem:[%s596 + $0x90] sm:$0xff]
        %v791 = vld [vmem:[%s596 + $0x98] sm:$0xf]
        %v792 = vld [vmem:[%s596 + $0x9c] sm:$0xff]
        %v793 = vld [vmem:[%s596 + $0xa4] sm:$0xf]
        %v794 = vld [vmem:[%s596 + $0xa8] sm:$0xff]
        %v795 = vld [vmem:[%s596 + $0xb0] sm:$0xf]
        %v796 = vld [vmem:[%s596 + $0xb4] sm:$0xff]
        %v797 = vld [vmem:[%s596 + $0xbc] sm:$0xf]
        %v798 = vld [vmem:[%s722] sm:$0x7]
        %v800 = vlaneseq
        %v801 = vshrl.u32 %v800, 7
        %v802 = vsub.s32 0, %v801
        %v803 = vrot.slane %v798, %v802
        %v804 = vlaneseq
        %v805 = vshrl.u32 %v804, 7
        %v806 = vsub.s32 1, %v805
        %v807 = vrot.slane %v798, %v806
        %v808 = vlaneseq
        %v809 = vshrl.u32 %v808, 7
        %v810 = vsub.s32 2, %v809
        %v811 = vrot.slane %v798, %v810
        %v847 = vunpack.c.l.b16 %v766
        %v848 = vunpack.c.h.b16 %v766
        %v849 = vunpack.c.l.b16 %v767
        %v850 = vunpack.c.l.b16 %v768
        %v851 = vunpack.c.h.b16 %v768
        %v852 = vunpack.c.l.b16 %v769
        %v853 = vunpack.c.l.b16 %v770
        %v854 = vunpack.c.h.b16 %v770
        %v855 = vunpack.c.l.b16 %v771
        %v856 = vunpack.c.l.b16 %v772
        %v857 = vunpack.c.h.b16 %v772
        %v858 = vunpack.c.l.b16 %v773
        %v859 = vunpack.c.l.b16 %v774
        %v860 = vunpack.c.h.b16 %v774
        %v861 = vunpack.c.l.b16 %v775
        %v862 = vunpack.c.l.b16 %v776
        %v863 = vunpack.c.h.b16 %v776
        %v864 = vunpack.c.l.b16 %v777
        %v865 = vunpack.c.l.b16 %v778
        %v866 = vunpack.c.h.b16 %v778
        %v867 = vunpack.c.l.b16 %v779
        %v868 = vunpack.c.l.b16 %v780
        %v869 = vunpack.c.h.b16 %v780
        %v870 = vunpack.c.l.b16 %v781
        %v871 = vunpack.c.l.b16 %v782
        %v872 = vunpack.c.h.b16 %v782
        %v873 = vunpack.c.l.b16 %v783
        %v874 = vunpack.c.l.b16 %v784
        %v875 = vunpack.c.h.b16 %v784
        %v876 = vunpack.c.l.b16 %v785
        %v877 = vunpack.c.l.b16 %v786
        %v878 = vunpack.c.h.b16 %v786
        %v879 = vunpack.c.l.b16 %v787
        %v880 = vunpack.c.l.b16 %v788
        %v881 = vunpack.c.h.b16 %v788
        %v882 = vunpack.c.l.b16 %v789
        %v883 = vunpack.c.l.b16 %v790
        %v884 = vunpack.c.h.b16 %v790
        %v885 = vunpack.c.l.b16 %v791
        %v886 = vunpack.c.l.b16 %v792
        %v887 = vunpack.c.h.b16 %v792
        %v888 = vunpack.c.l.b16 %v793
        %v889 = vunpack.c.l.b16 %v794
        %v890 = vunpack.c.h.b16 %v794
        %v891 = vunpack.c.l.b16 %v795
        %v892 = vunpack.c.l.b16 %v796
        %v893 = vunpack.c.h.b16 %v796
        %v894 = vunpack.c.l.b16 %v797
        %v895 = vpack.c.b16 %v850, %v847
        %v896 = vpack.c.b16 %v851, %v848
        %v897 = vpack.c.b16 %v852, %v849
        %v898 = vpack.c.b16 %v856, %v853
        %v899 = vpack.c.b16 %v857, %v854
        %v900 = vpack.c.b16 %v858, %v855
        %v901 = vpack.c.b16 %v862, %v859
        %v902 = vpack.c.b16 %v863, %v860
        %v903 = vpack.c.b16 %v864, %v861
        %v904 = vpack.c.b16 %v868, %v865
        %v905 = vpack.c.b16 %v869, %v866
        %v906 = vpack.c.b16 %v870, %v867
        %v907 = vpack.c.b16 %v874, %v871
        %v908 = vpack.c.b16 %v875, %v872
        %v909 = vpack.c.b16 %v876, %v873
        %v910 = vpack.c.b16 %v880, %v877
        %v911 = vpack.c.b16 %v881, %v878
        %v912 = vpack.c.b16 %v882, %v879
        %v913 = vpack.c.b16 %v886, %v883
        %v914 = vpack.c.b16 %v887, %v884
        %v915 = vpack.c.b16 %v888, %v885
        %v916 = vpack.c.b16 %v892, %v889
        %v917 = vpack.c.b16 %v893, %v890
        %v918 = vpack.c.b16 %v894, %v891
        %943 = vmatprep.subr.bf16.mxu0 %v896
        %944 = vmatpush1.bf16.msra.mxu0 %v895
        %945 = vmatprep.subr.bf16.mxu0 %v899
        %946 = vmatpush1.bf16.msra.mxu0 %v898
        %947 = vmatprep.subr.bf16.mxu0 %v902
        %948 = vmatpush1.bf16.msra.mxu0 %v901
        %949 = vmatprep.subr.bf16.mxu0 %v905
        %950 = vmatpush1.bf16.msra.mxu0 %v904
        %951 = vmatprep.subr.bf16.mxu0 %v908
        %952 = vmatpush1.bf16.msra.mxu0 %v907
        %953 = vmatprep.subr.bf16.mxu0 %v911
        %954 = vmatpush1.bf16.msra.mxu0 %v910
        %955 = vmatprep.subr.bf16.mxu0 %v914
        %956 = vmatpush1.bf16.msra.mxu0 %v913
        %957 = vmatprep.subr.bf16.mxu0 %v917
        %958 = vmatpush1.bf16.msra.mxu0 %v916
        %959 = vmatprep.subr.bf16.mxu0 0
        %960 = vmatpush1.bf16.msra.mxu0 0
        %961 = vmatprep.subr.bf16.mxu0 0
        %962 = vmatpush1.bf16.msra.mxu0 0
        %963 = vmatprep.subr.bf16.mxu0 0
        %964 = vmatpush1.bf16.msra.mxu0 0
        %965 = vmatprep.subr.bf16.mxu0 0
        %966 = vmatpush1.bf16.msra.mxu0 0
        %967 = vmatprep.subr.bf16.mxu0 0
        %968 = vmatpush1.bf16.msra.mxu0 0
        %969 = vmatprep.subr.bf16.mxu0 0
        %970 = vmatpush1.bf16.msra.mxu0 0
        %971 = vmatprep.subr.bf16.mxu0 0
        %972 = vmatpush1.bf16.msra.mxu0 0
        %973 = vmatprep.subr.bf16.mxu0 0
        %974 = vmatpush1.bf16.msra.mxu0 0
        %975 = vmatprep.mubr.bf16.mxu0 0
        %976 = vmatmul.mubr.bf16.gmra.mrb[0].mxu0 %v765
        %v977 = vpop.f32.mrb[0].mxu0
        %v978 = vadd.f32 %v803, %v977
        %v979 = vpop.f32.mrb[0].mxu0
        %v980 = vadd.f32 %v807, %v979
        %v981 = vpop.f32.mrb[0].mxu0
        %v982 = vadd.f32 %v803, %v981
        %v983 = vpop.f32.mrb[0].mxu0
        %v984 = vadd.f32 %v807, %v983
        %985 = vdwg.mxu0
        %986 = vmatprep.subr.bf16.mxu0 0
        %987 = vmatpush1.bf16.msra.mxu0 %v897
        %988 = vmatprep.subr.bf16.mxu0 0
        %989 = vmatpush1.bf16.msra.mxu0 %v900
        %990 = vmatprep.subr.bf16.mxu0 0
        %991 = vmatpush1.bf16.msra.mxu0 %v903
        %992 = vmatprep.subr.bf16.mxu0 0
        %993 = vmatpush1.bf16.msra.mxu0 %v906
        %994 = vmatprep.subr.bf16.mxu0 0
        %995 = vmatpush1.bf16.msra.mxu0 %v909
        %996 = vmatprep.subr.bf16.mxu0 0
        %997 = vmatpush1.bf16.msra.mxu0 %v912
        %998 = vmatprep.subr.bf16.mxu0 0
        %999 = vmatpush1.bf16.msra.mxu0 %v915
        %1000 = vmatprep.subr.bf16.mxu0 0
        %1001 = vmatpush1.bf16.msra.mxu0 %v918
        %1002 = vmatprep.subr.bf16.mxu0 0
        %1003 = vmatpush1.bf16.msra.mxu0 0
        %1004 = vmatprep.subr.bf16.mxu0 0
        %1005 = vmatpush1.bf16.msra.mxu0 0
        %1006 = vmatprep.subr.bf16.mxu0 0
        %1007 = vmatpush1.bf16.msra.mxu0 0
        %1008 = vmatprep.subr.bf16.mxu0 0
        %1009 = vmatpush1.bf16.msra.mxu0 0
        %1010 = vmatprep.subr.bf16.mxu0 0
        %1011 = vmatpush1.bf16.msra.mxu0 0
        %1012 = vmatprep.subr.bf16.mxu0 0
        %1013 = vmatpush1.bf16.msra.mxu0 0
        %1014 = vmatprep.subr.bf16.mxu0 0
        %1015 = vmatpush1.bf16.msra.mxu0 0
        %1016 = vmatprep.subr.bf16.mxu0 0
        %1017 = vmatpush1.bf16.msra.mxu0 0
        %1018 = vmatprep.mubr.bf16.mxu0 0
        %1019 = vmatmul.mubr.bf16.gmra.mrb[0].mxu0 %v765
        %v1020 = vpop.f32.mrb[0].mxu0
        %v1021 = vadd.f32 %v811, %v1020
        %v1022 = vpop.f32.mrb[0].mxu0
        %v1023 = vpop.f32.mrb[0].mxu0
        %v1024 = vadd.f32 %v811, %v1023
        %v1025 = vpop.f32.mrb[0].mxu0
        %1026 = vdwg.mxu0
        %v1027 = vpack.c.bf16 %v982, %v978
        %v1028 = vpack.c.bf16 %v984, %v980
        %v1029 = vpack.c.bf16 %v1024, %v1021
        %v1031 = vunpack.c.l.b16 %v1027
        %v1032 = vunpack.c.h.b16 %v1027
        %v1033 = vpack.c.b16 %v1031, %v1031
        %v1034 = vpack.c.b16 %v1032, %v1032
        %v1036 = vunpack.c.l.b16 %v1028
        %v1037 = vunpack.c.h.b16 %v1028
        %v1038 = vpack.c.b16 %v1036, %v1036
        %v1039 = vpack.c.b16 %v1037, %v1037
        %v1041 = vunpack.c.l.b16 %v1029
        %v1042 = vunpack.c.h.b16 %v1029
        %v1043 = vpack.c.b16 %v1041, %v1041
        %v1044 = vpack.c.b16 %v1042, %v1042
        %1045 = vrot.lane.b32.xlu0 %v1033, 96
        %v1046 = vpop.permute.xlu0 %1045
        %1047 = vrot.lane.b32.xlu0 %v1034, 96
        %v1048 = vpop.permute.xlu0 %1047
        %1049 = vrot.lane.b32.xlu0 %v1033, 64
        %v1050 = vpop.permute.xlu0 %1049
        %1051 = vrot.lane.b32.xlu0 %v1034, 64
        %v1052 = vpop.permute.xlu0 %1051
        %1053 = vrot.lane.b32.xlu0 %v1033, 32
        %v1054 = vpop.permute.xlu0 %1053
        %1055 = vrot.lane.b32.xlu0 %v1034, 32
        %v1056 = vpop.permute.xlu0 %1055
        %1057 = vrot.lane.b32.xlu0 %v1038, 96
        %v1058 = vpop.permute.xlu0 %1057
        %1059 = vrot.lane.b32.xlu0 %v1039, 96
        %v1060 = vpop.permute.xlu0 %1059
        %1061 = vrot.lane.b32.xlu0 %v1038, 64
        %v1062 = vpop.permute.xlu0 %1061
        %1063 = vrot.lane.b32.xlu0 %v1039, 64
        %v1064 = vpop.permute.xlu0 %1063
        %1065 = vrot.lane.b32.xlu0 %v1038, 32
        %v1066 = vpop.permute.xlu0 %1065
        %1067 = vrot.lane.b32.xlu0 %v1039, 32
        %v1068 = vpop.permute.xlu0 %1067
        %1069 = vrot.lane.b32.xlu0 %v1043, 96
        %v1070 = vpop.permute.xlu0 %1069
        %1071 = vrot.lane.b32.xlu0 %v1044, 96
        %v1072 = vpop.permute.xlu0 %1071
        %1073 = vrot.lane.b32.xlu0 %v1043, 64
        %v1074 = vpop.permute.xlu0 %1073
        %1075 = vrot.lane.b32.xlu0 %v1044, 64
        %v1076 = vpop.permute.xlu0 %1075
        %1077 = vrot.lane.b32.xlu0 %v1043, 32
        %v1078 = vpop.permute.xlu0 %1077
        %1079 = vrot.lane.b32.xlu0 %v1044, 32
        %v1080 = vpop.permute.xlu0 %1079
        %vm1081 = vcmask 261120
        %v1083 = vsel %vm1081, %v1033, 0
        %v1086 = vsel %vm1081, %v1038, 0
        %1088 = vmatprep.subr.bf16.mxu0 0
        %1089 = vmatpush1.bf16.xpose.msra.mxu0 %v1086
        %1090 = vmatprep.subr.bf16.mxu0 0
        %1091 = vmatpush1.bf16.xpose.msra.mxu0 0
        %1092 = vmatprep.subr.bf16.mxu0 0
        %1093 = vmatpush1.bf16.xpose.msra.mxu0 0
        %1094 = vmatprep.subr.bf16.mxu0 0
        %1095 = vmatpush1.bf16.xpose.msra.mxu0 0
        %1096 = vmatprep.subr.bf16.mxu0 0
        %1097 = vmatpush1.bf16.xpose.msra.mxu0 0
        %1098 = vmatprep.subr.bf16.mxu0 0
        %1099 = vmatpush1.bf16.xpose.msra.mxu0 0
        %1100 = vmatprep.subr.bf16.mxu0 0
        %1101 = vmatpush1.bf16.xpose.msra.mxu0 0
        %1102 = vmatprep.subr.bf16.mxu0 0
        %1103 = vmatpush1.bf16.xpose.msra.mxu0 0
        %1104 = vmatprep.subr.bf16.mxu0 0
        %1105 = vmatpush1.bf16.xpose.msra.mxu0 0
        %1106 = vmatprep.subr.bf16.mxu0 0
        %1107 = vmatpush1.bf16.xpose.msra.mxu0 0
        %1108 = vmatprep.subr.bf16.mxu0 0
        %1109 = vmatpush1.bf16.xpose.msra.mxu0 0
        %1110 = vmatprep.subr.bf16.mxu0 0
        %1111 = vmatpush1.bf16.xpose.msra.mxu0 0
        %1112 = vmatprep.subr.bf16.mxu0 0
        %1113 = vmatpush1.bf16.xpose.msra.mxu0 0
        %1114 = vmatprep.subr.bf16.mxu0 0
        %1115 = vmatpush1.bf16.xpose.msra.mxu0 0
        %1116 = vmatprep.subr.bf16.mxu0 0
        %1117 = vmatpush1.bf16.xpose.msra.mxu0 0
        %1118 = vmatprep.subr.bf16.mxu0 0
        %1119 = vmatpush1.bf16.xpose.msra.mxu0 0
        %1120 = vmatprep.mubr.bf16.mxu0 0
        %1121 = vmatmul.mubr.bf16.gmra.mrb[0].mxu0 %v1083
        %v1122 = vpop.f32.mrb[0].mxu0
        %v1123 = vadd.f32 0.0, %v1122
        %v1124 = vpop.f32.mrb[0].mxu0
        %v1125 = vpop.f32.mrb[0].mxu0
        %v1126 = vpop.f32.mrb[0].mxu0
        %1127 = vdwg.mxu0
        %v1129 = vsel %vm1081, %v1034, 0
        %v1132 = vsel %vm1081, %v1039, 0
        %1134 = vmatprep.subr.bf16.mxu0 0
        %1135 = vmatpush1.bf16.xpose.msra.mxu0 %v1132
        %1136 = vmatprep.subr.bf16.mxu0 0
        %1137 = vmatpush1.bf16.xpose.msra.mxu0 0
        %1138 = vmatprep.subr.bf16.mxu0 0
        %1139 = vmatpush1.bf16.xpose.msra.mxu0 0
        %1140 = vmatprep.subr.bf16.mxu0 0
        %1141 = vmatpush1.bf16.xpose.msra.mxu0 0
        %1142 = vmatprep.subr.bf16.mxu0 0
        %1143 = vmatpush1.bf16.xpose.msra.mxu0 0
        %1144 = vmatprep.subr.bf16.mxu0 0
        %1145 = vmatpush1.bf16.xpose.msra.mxu0 0
        %1146 = vmatprep.subr.bf16.mxu0 0
        %1147 = vmatpush1.bf16.xpose.msra.mxu0 0
        %1148 = vmatprep.subr.bf16.mxu0 0
        %1149 = vmatpush1.bf16.xpose.msra.mxu0 0
        %1150 = vmatprep.subr.bf16.mxu0 0
        %1151 = vmatpush1.bf16.xpose.msra.mxu0 0
        %1152 = vmatprep.subr.bf16.mxu0 0
        %1153 = vmatpush1.bf16.xpose.msra.mxu0 0
        %1154 = vmatprep.subr.bf16.mxu0 0
        %1155 = vmatpush1.bf16.xpose.msra.mxu0 0
        %1156 = vmatprep.subr.bf16.mxu0 0
        %1157 = vmatpush1.bf16.xpose.msra.mxu0 0
        %1158 = vmatprep.subr.bf16.mxu0 0
        %1159 = vmatpush1.bf16.xpose.msra.mxu0 0
        %1160 = vmatprep.subr.bf16.mxu0 0
        %1161 = vmatpush1.bf16.xpose.msra.mxu0 0
        %1162 = vmatprep.subr.bf16.mxu0 0
        %1163 = vmatpush1.bf16.xpose.msra.mxu0 0
        %1164 = vmatprep.subr.bf16.mxu0 0
        %1165 = vmatpush1.bf16.xpose.msra.mxu0 0
        %1166 = vmatprep.mubr.bf16.mxu0 0
        %1167 = vmatmul.mubr.bf16.gmra.mrb[0].mxu0 %v1129
        %v1168 = vpop.f32.mrb[0].mxu0
        %v1169 = vadd.f32 0.0, %v1168
        %v1170 = vpop.f32.mrb[0].mxu0
        %v1171 = vpop.f32.mrb[0].mxu0
        %v1172 = vpop.f32.mrb[0].mxu0
        %1173 = vdwg.mxu0
        %v1175 = vsel %vm1081, %v1046, 0
        %v1178 = vsel %vm1081, %v1058, 0
        %1180 = vmatprep.subr.bf16.mxu0 0
        %1181 = vmatpush1.bf16.xpose.msra.mxu0 %v1178
        %1182 = vmatprep.subr.bf16.mxu0 0
        %1183 = vmatpush1.bf16.xpose.msra.mxu0 0
        %1184 = vmatprep.subr.bf16.mxu0 0
        %1185 = vmatpush1.bf16.xpose.msra.mxu0 0
        %1186 = vmatprep.subr.bf16.mxu0 0
        %1187 = vmatpush1.bf16.xpose.msra.mxu0 0
        %1188 = vmatprep.subr.bf16.mxu0 0
        %1189 = vmatpush1.bf16.xpose.msra.mxu0 0
        %1190 = vmatprep.subr.bf16.mxu0 0
        %1191 = vmatpush1.bf16.xpose.msra.mxu0 0
        %1192 = vmatprep.subr.bf16.mxu0 0
        %1193 = vmatpush1.bf16.xpose.msra.mxu0 0
        %1194 = vmatprep.subr.bf16.mxu0 0
        %1195 = vmatpush1.bf16.xpose.msra.mxu0 0
        %1196 = vmatprep.subr.bf16.mxu0 0
        %1197 = vmatpush1.bf16.xpose.msra.mxu0 0
        %1198 = vmatprep.subr.bf16.mxu0 0
        %1199 = vmatpush1.bf16.xpose.msra.mxu0 0
        %1200 = vmatprep.subr.bf16.mxu0 0
        %1201 = vmatpush1.bf16.xpose.msra.mxu0 0
        %1202 = vmatprep.subr.bf16.mxu0 0
        %1203 = vmatpush1.bf16.xpose.msra.mxu0 0
        %1204 = vmatprep.subr.bf16.mxu0 0
        %1205 = vmatpush1.bf16.xpose.msra.mxu0 0
        %1206 = vmatprep.subr.bf16.mxu0 0
        %1207 = vmatpush1.bf16.xpose.msra.mxu0 0
        %1208 = vmatprep.subr.bf16.mxu0 0
        %1209 = vmatpush1.bf16.xpose.msra.mxu0 0
        %1210 = vmatprep.subr.bf16.mxu0 0
        %1211 = vmatpush1.bf16.xpose.msra.mxu0 0
        %1212 = vmatprep.mubr.bf16.mxu0 0
        %1213 = vmatmul.mubr.bf16.gmra.mrb[0].mxu0 %v1175
        %v1214 = vpop.f32.mrb[0].mxu0
        %v1215 = vadd.f32 0.0, %v1214
        %v1216 = vpop.f32.mrb[0].mxu0
        %v1217 = vpop.f32.mrb[0].mxu0
        %v1218 = vpop.f32.mrb[0].mxu0
        %1219 = vdwg.mxu0
        %v1221 = vsel %vm1081, %v1048, 0
        %v1224 = vsel %vm1081, %v1060, 0
        %1226 = vmatprep.subr.bf16.mxu0 0
        %1227 = vmatpush1.bf16.xpose.msra.mxu0 %v1224
        %1228 = vmatprep.subr.bf16.mxu0 0
        %1229 = vmatpush1.bf16.xpose.msra.mxu0 0
        %1230 = vmatprep.subr.bf16.mxu0 0
        %1231 = vmatpush1.bf16.xpose.msra.mxu0 0
        %1232 = vmatprep.subr.bf16.mxu0 0
        %1233 = vmatpush1.bf16.xpose.msra.mxu0 0
        %1234 = vmatprep.subr.bf16.mxu0 0
        %1235 = vmatpush1.bf16.xpose.msra.mxu0 0
        %1236 = vmatprep.subr.bf16.mxu0 0
        %1237 = vmatpush1.bf16.xpose.msra.mxu0 0
        %1238 = vmatprep.subr.bf16.mxu0 0
        %1239 = vmatpush1.bf16.xpose.msra.mxu0 0
        %1240 = vmatprep.subr.bf16.mxu0 0
        %1241 = vmatpush1.bf16.xpose.msra.mxu0 0
        %1242 = vmatprep.subr.bf16.mxu0 0
        %1243 = vmatpush1.bf16.xpose.msra.mxu0 0
        %1244 = vmatprep.subr.bf16.mxu0 0
        %1245 = vmatpush1.bf16.xpose.msra.mxu0 0
        %1246 = vmatprep.subr.bf16.mxu0 0
        %1247 = vmatpush1.bf16.xpose.msra.mxu0 0
        %1248 = vmatprep.subr.bf16.mxu0 0
        %1249 = vmatpush1.bf16.xpose.msra.mxu0 0
        %1250 = vmatprep.subr.bf16.mxu0 0
        %1251 = vmatpush1.bf16.xpose.msra.mxu0 0
        %1252 = vmatprep.subr.bf16.mxu0 0
        %1253 = vmatpush1.bf16.xpose.msra.mxu0 0
        %1254 = vmatprep.subr.bf16.mxu0 0
        %1255 = vmatpush1.bf16.xpose.msra.mxu0 0
        %1256 = vmatprep.subr.bf16.mxu0 0
        %1257 = vmatpush1.bf16.xpose.msra.mxu0 0
        %1258 = vmatprep.mubr.bf16.mxu0 0
        %1259 = vmatmul.mubr.bf16.gmra.mrb[0].mxu0 %v1221
        %v1260 = vpop.f32.mrb[0].mxu0
        %v1261 = vadd.f32 0.0, %v1260
        %v1262 = vpop.f32.mrb[0].mxu0
        %v1263 = vpop.f32.mrb[0].mxu0
        %v1264 = vpop.f32.mrb[0].mxu0
        %1265 = vdwg.mxu0
        %v1267 = vsel %vm1081, %v1050, 0
        %v1270 = vsel %vm1081, %v1062, 0
        %1272 = vmatprep.subr.bf16.mxu0 0
        %1273 = vmatpush1.bf16.xpose.msra.mxu0 %v1270
        %1274 = vmatprep.subr.bf16.mxu0 0
        %1275 = vmatpush1.bf16.xpose.msra.mxu0 0
        %1276 = vmatprep.subr.bf16.mxu0 0
        %1277 = vmatpush1.bf16.xpose.msra.mxu0 0
        %1278 = vmatprep.subr.bf16.mxu0 0
        %1279 = vmatpush1.bf16.xpose.msra.mxu0 0
        %1280 = vmatprep.subr.bf16.mxu0 0
        %1281 = vmatpush1.bf16.xpose.msra.mxu0 0
        %1282 = vmatprep.subr.bf16.mxu0 0
        %1283 = vmatpush1.bf16.xpose.msra.mxu0 0
        %1284 = vmatprep.subr.bf16.mxu0 0
        %1285 = vmatpush1.bf16.xpose.msra.mxu0 0
        %1286 = vmatprep.subr.bf16.mxu0 0
        %1287 = vmatpush1.bf16.xpose.msra.mxu0 0
        %1288 = vmatprep.subr.bf16.mxu0 0
        %1289 = vmatpush1.bf16.xpose.msra.mxu0 0
        %1290 = vmatprep.subr.bf16.mxu0 0
        %1291 = vmatpush1.bf16.xpose.msra.mxu0 0
        %1292 = vmatprep.subr.bf16.mxu0 0
        %1293 = vmatpush1.bf16.xpose.msra.mxu0 0
        %1294 = vmatprep.subr.bf16.mxu0 0
        %1295 = vmatpush1.bf16.xpose.msra.mxu0 0
        %1296 = vmatprep.subr.bf16.mxu0 0
        %1297 = vmatpush1.bf16.xpose.msra.mxu0 0
        %1298 = vmatprep.subr.bf16.mxu0 0
        %1299 = vmatpush1.bf16.xpose.msra.mxu0 0
        %1300 = vmatprep.subr.bf16.mxu0 0
        %1301 = vmatpush1.bf16.xpose.msra.mxu0 0
        %1302 = vmatprep.subr.bf16.mxu0 0
        %1303 = vmatpush1.bf16.xpose.msra.mxu0 0
        %1304 = vmatprep.mubr.bf16.mxu0 0
        %1305 = vmatmul.mubr.bf16.gmra.mrb[0].mxu0 %v1267
        %v1306 = vpop.f32.mrb[0].mxu0
        %v1307 = vadd.f32 0.0, %v1306
        %v1308 = vpop.f32.mrb[0].mxu0
        %v1309 = vpop.f32.mrb[0].mxu0
        %v1310 = vpop.f32.mrb[0].mxu0
        %1311 = vdwg.mxu0
        %v1313 = vsel %vm1081, %v1052, 0
        %v1316 = vsel %vm1081, %v1064, 0
        %1318 = vmatprep.subr.bf16.mxu0 0
        %1319 = vmatpush1.bf16.xpose.msra.mxu0 %v1316
        %1320 = vmatprep.subr.bf16.mxu0 0
        %1321 = vmatpush1.bf16.xpose.msra.mxu0 0
        %1322 = vmatprep.subr.bf16.mxu0 0
        %1323 = vmatpush1.bf16.xpose.msra.mxu0 0
        %1324 = vmatprep.subr.bf16.mxu0 0
        %1325 = vmatpush1.bf16.xpose.msra.mxu0 0
        %1326 = vmatprep.subr.bf16.mxu0 0
        %1327 = vmatpush1.bf16.xpose.msra.mxu0 0
        %1328 = vmatprep.subr.bf16.mxu0 0
        %1329 = vmatpush1.bf16.xpose.msra.mxu0 0
        %1330 = vmatprep.subr.bf16.mxu0 0
        %1331 = vmatpush1.bf16.xpose.msra.mxu0 0
        %1332 = vmatprep.subr.bf16.mxu0 0
        %1333 = vmatpush1.bf16.xpose.msra.mxu0 0
        %1334 = vmatprep.subr.bf16.mxu0 0
        %1335 = vmatpush1.bf16.xpose.msra.mxu0 0
        %1336 = vmatprep.subr.bf16.mxu0 0
        %1337 = vmatpush1.bf16.xpose.msra.mxu0 0
        %1338 = vmatprep.subr.bf16.mxu0 0
        %1339 = vmatpush1.bf16.xpose.msra.mxu0 0
        %1340 = vmatprep.subr.bf16.mxu0 0
        %1341 = vmatpush1.bf16.xpose.msra.mxu0 0
        %1342 = vmatprep.subr.bf16.mxu0 0
        %1343 = vmatpush1.bf16.xpose.msra.mxu0 0
        %1344 = vmatprep.subr.bf16.mxu0 0
        %1345 = vmatpush1.bf16.xpose.msra.mxu0 0
        %1346 = vmatprep.subr.bf16.mxu0 0
        %1347 = vmatpush1.bf16.xpose.msra.mxu0 0
        %1348 = vmatprep.subr.bf16.mxu0 0
        %1349 = vmatpush1.bf16.xpose.msra.mxu0 0
        %1350 = vmatprep.mubr.bf16.mxu0 0
        %1351 = vmatmul.mubr.bf16.gmra.mrb[0].mxu0 %v1313
        %v1352 = vpop.f32.mrb[0].mxu0
        %v1353 = vadd.f32 0.0, %v1352
        %v1354 = vpop.f32.mrb[0].mxu0
        %v1355 = vpop.f32.mrb[0].mxu0
        %v1356 = vpop.f32.mrb[0].mxu0
        %1357 = vdwg.mxu0
        %v1359 = vsel %vm1081, %v1054, 0
        %v1362 = vsel %vm1081, %v1066, 0
        %1364 = vmatprep.subr.bf16.mxu0 0
        %1365 = vmatpush1.bf16.xpose.msra.mxu0 %v1362
        %1366 = vmatprep.subr.bf16.mxu0 0
        %1367 = vmatpush1.bf16.xpose.msra.mxu0 0
        %1368 = vmatprep.subr.bf16.mxu0 0
        %1369 = vmatpush1.bf16.xpose.msra.mxu0 0
        %1370 = vmatprep.subr.bf16.mxu0 0
        %1371 = vmatpush1.bf16.xpose.msra.mxu0 0
        %1372 = vmatprep.subr.bf16.mxu0 0
        %1373 = vmatpush1.bf16.xpose.msra.mxu0 0
        %1374 = vmatprep.subr.bf16.mxu0 0
        %1375 = vmatpush1.bf16.xpose.msra.mxu0 0
        %1376 = vmatprep.subr.bf16.mxu0 0
        %1377 = vmatpush1.bf16.xpose.msra.mxu0 0
        %1378 = vmatprep.subr.bf16.mxu0 0
        %1379 = vmatpush1.bf16.xpose.msra.mxu0 0
        %1380 = vmatprep.subr.bf16.mxu0 0
        %1381 = vmatpush1.bf16.xpose.msra.mxu0 0
        %1382 = vmatprep.subr.bf16.mxu0 0
        %1383 = vmatpush1.bf16.xpose.msra.mxu0 0
        %1384 = vmatprep.subr.bf16.mxu0 0
        %1385 = vmatpush1.bf16.xpose.msra.mxu0 0
        %1386 = vmatprep.subr.bf16.mxu0 0
        %1387 = vmatpush1.bf16.xpose.msra.mxu0 0
        %1388 = vmatprep.subr.bf16.mxu0 0
        %1389 = vmatpush1.bf16.xpose.msra.mxu0 0
        %1390 = vmatprep.subr.bf16.mxu0 0
        %1391 = vmatpush1.bf16.xpose.msra.mxu0 0
        %1392 = vmatprep.subr.bf16.mxu0 0
        %1393 = vmatpush1.bf16.xpose.msra.mxu0 0
        %1394 = vmatprep.subr.bf16.mxu0 0
        %1395 = vmatpush1.bf16.xpose.msra.mxu0 0
        %1396 = vmatprep.mubr.bf16.mxu0 0
        %1397 = vmatmul.mubr.bf16.gmra.mrb[0].mxu0 %v1359
        %v1398 = vpop.f32.mrb[0].mxu0
        %v1399 = vadd.f32 0.0, %v1398
        %v1400 = vpop.f32.mrb[0].mxu0
        %v1401 = vpop.f32.mrb[0].mxu0
        %v1402 = vpop.f32.mrb[0].mxu0
        %1403 = vdwg.mxu0
        %v1405 = vsel %vm1081, %v1056, 0
        %v1408 = vsel %vm1081, %v1068, 0
        %1410 = vmatprep.subr.bf16.mxu0 0
        %1411 = vmatpush1.bf16.xpose.msra.mxu0 %v1408
        %1412 = vmatprep.subr.bf16.mxu0 0
        %1413 = vmatpush1.bf16.xpose.msra.mxu0 0
        %1414 = vmatprep.subr.bf16.mxu0 0
        %1415 = vmatpush1.bf16.xpose.msra.mxu0 0
        %1416 = vmatprep.subr.bf16.mxu0 0
        %1417 = vmatpush1.bf16.xpose.msra.mxu0 0
        %1418 = vmatprep.subr.bf16.mxu0 0
        %1419 = vmatpush1.bf16.xpose.msra.mxu0 0
        %1420 = vmatprep.subr.bf16.mxu0 0
        %1421 = vmatpush1.bf16.xpose.msra.mxu0 0
        %1422 = vmatprep.subr.bf16.mxu0 0
        %1423 = vmatpush1.bf16.xpose.msra.mxu0 0
        %1424 = vmatprep.subr.bf16.mxu0 0
        %1425 = vmatpush1.bf16.xpose.msra.mxu0 0
        %1426 = vmatprep.subr.bf16.mxu0 0
        %1427 = vmatpush1.bf16.xpose.msra.mxu0 0
        %1428 = vmatprep.subr.bf16.mxu0 0
        %1429 = vmatpush1.bf16.xpose.msra.mxu0 0
        %1430 = vmatprep.subr.bf16.mxu0 0
        %1431 = vmatpush1.bf16.xpose.msra.mxu0 0
        %1432 = vmatprep.subr.bf16.mxu0 0
        %1433 = vmatpush1.bf16.xpose.msra.mxu0 0
        %1434 = vmatprep.subr.bf16.mxu0 0
        %1435 = vmatpush1.bf16.xpose.msra.mxu0 0
        %1436 = vmatprep.subr.bf16.mxu0 0
        %1437 = vmatpush1.bf16.xpose.msra.mxu0 0
        %1438 = vmatprep.subr.bf16.mxu0 0
        %1439 = vmatpush1.bf16.xpose.msra.mxu0 0
        %1440 = vmatprep.subr.bf16.mxu0 0
        %1441 = vmatpush1.bf16.xpose.msra.mxu0 0
        %1442 = vmatprep.mubr.bf16.mxu0 0
        %1443 = vmatmul.mubr.bf16.gmra.mrb[0].mxu0 %v1405
        %v1444 = vpop.f32.mrb[0].mxu0
        %v1445 = vadd.f32 0.0, %v1444
        %v1446 = vpop.f32.mrb[0].mxu0
        %v1447 = vpop.f32.mrb[0].mxu0
        %v1448 = vpop.f32.mrb[0].mxu0
        %1449 = vdwg.mxu0
        %v1450 = vld [vmem:[%s717] sm:$0x1]
        %v1451 = vld [vmem:[%s717 + $0x1] sm:$0x1]
        %v1454 = vlaneseq
        %v1455 = vshrl.u32 %v1454, 7
        %v1456 = vsub.s32 0, %v1455
        %v1457 = vrot.slane %v1450, %v1456
        %v1458 = vlaneseq
        %v1459 = vshrl.u32 %v1458, 7
        %v1460 = vsub.s32 0, %v1459
        %v1461 = vrot.slane %v1451, %v1460
        %v1464 = vadd.f32 %v1123, %v1457
        %v1465 = vadd.f32 %v1169, %v1461
        %v1466 = vadd.f32 %v1215, %v1457
        %v1467 = vadd.f32 %v1261, %v1461
        %v1468 = vadd.f32 %v1307, %v1457
        %v1469 = vadd.f32 %v1353, %v1461
        %v1470 = vadd.f32 %v1399, %v1457
        %v1471 = vadd.f32 %v1445, %v1461
        %vm1472 = vcmask 64512
        %v1473 = vsel %vm1472, %v1464, -inf
        %1474 = vmax.xlane.f32.xlu0 %v1473
        %v1475 = vpop.xlane.xlu0 %1474
        %v1476 = vsel %vm1472, %v1465, -inf
        %1477 = vmax.xlane.f32.xlu0 %v1476
        %v1478 = vpop.xlane.xlu0 %1477
        %v1479 = vsel %vm1472, %v1466, -inf
        %1480 = vmax.xlane.f32.xlu0 %v1479
        %v1481 = vpop.xlane.xlu0 %1480
        %v1482 = vsel %vm1472, %v1467, -inf
        %1483 = vmax.xlane.f32.xlu0 %v1482
        %v1484 = vpop.xlane.xlu0 %1483
        %v1485 = vsel %vm1472, %v1468, -inf
        %1486 = vmax.xlane.f32.xlu0 %v1485
        %v1487 = vpop.xlane.xlu0 %1486
        %v1488 = vsel %vm1472, %v1469, -inf
        %1489 = vmax.xlane.f32.xlu0 %v1488
        %v1490 = vpop.xlane.xlu0 %1489
        %v1491 = vsel %vm1472, %v1470, -inf
        %1492 = vmax.xlane.f32.xlu0 %v1491
        %v1493 = vpop.xlane.xlu0 %1492
        %v1494 = vsel %vm1472, %v1471, -inf
        %1495 = vmax.xlane.f32.xlu0 %v1494
        %v1496 = vpop.xlane.xlu0 %1495
        %v1497 = vsub.f32 %v1464, %v1475
        %v1498 = vsub.f32 %v1465, %v1478
        %v1499 = vsub.f32 %v1466, %v1481
        %v1500 = vsub.f32 %v1467, %v1484
        %v1501 = vsub.f32 %v1468, %v1487
        %v1502 = vsub.f32 %v1469, %v1490
        %v1503 = vsub.f32 %v1470, %v1493
        %v1504 = vsub.f32 %v1471, %v1496
        %v1505 = vmul.f32 %v1497, 1.442695
        %v1506 = vpow.pop %v1505
        %v1507 = vmul.f32 %v1498, 1.442695
        %v1508 = vpow.pop %v1507
        %v1509 = vmul.f32 %v1499, 1.442695
        %v1510 = vpow.pop %v1509
        %v1511 = vmul.f32 %v1500, 1.442695
        %v1512 = vpow.pop %v1511
        %v1513 = vmul.f32 %v1501, 1.442695
        %v1514 = vpow.pop %v1513
        %v1515 = vmul.f32 %v1502, 1.442695
        %v1516 = vpow.pop %v1515
        %v1517 = vmul.f32 %v1503, 1.442695
        %v1518 = vpow.pop %v1517
        %v1519 = vmul.f32 %v1504, 1.442695
        %v1520 = vpow.pop %v1519
        %v1521 = vsel %vm1472, %v1506, 0.0
        %1522 = vadd.xlane.f32.xlu0 %v1521
        %v1523 = vpop.xlane.xlu0 %1522
        %v1524 = vsel %vm1472, %v1508, 0.0
        %1525 = vadd.xlane.f32.xlu0 %v1524
        %v1526 = vpop.xlane.xlu0 %1525
        %v1527 = vsel %vm1472, %v1510, 0.0
        %1528 = vadd.xlane.f32.xlu0 %v1527
        %v1529 = vpop.xlane.xlu0 %1528
        %v1530 = vsel %vm1472, %v1512, 0.0
        %1531 = vadd.xlane.f32.xlu0 %v1530
        %v1532 = vpop.xlane.xlu0 %1531
        %v1533 = vsel %vm1472, %v1514, 0.0
        %1534 = vadd.xlane.f32.xlu0 %v1533
        %v1535 = vpop.xlane.xlu0 %1534
        %v1536 = vsel %vm1472, %v1516, 0.0
        %1537 = vadd.xlane.f32.xlu0 %v1536
        %v1538 = vpop.xlane.xlu0 %1537
        %v1539 = vsel %vm1472, %v1518, 0.0
        %1540 = vadd.xlane.f32.xlu0 %v1539
        %v1541 = vpop.xlane.xlu0 %1540
        %v1542 = vsel %vm1472, %v1520, 0.0
        %1543 = vadd.xlane.f32.xlu0 %v1542
        %v1544 = vpop.xlane.xlu0 %1543
        %v1545 = vrcp.pop %v1523
        %v1546 = vrcp.pop %v1526
        %v1547 = vrcp.pop %v1529
        %v1548 = vrcp.pop %v1532
        %v1549 = vrcp.pop %v1535
        %v1550 = vrcp.pop %v1538
        %v1551 = vrcp.pop %v1541
        %v1552 = vrcp.pop %v1544
        %v1553 = vmul.f32 %v1506, %v1545
        %v1554 = vmul.f32 %v1508, %v1546
        %v1555 = vmul.f32 %v1510, %v1547
        %v1556 = vmul.f32 %v1512, %v1548
        %v1557 = vmul.f32 %v1514, %v1549
        %v1558 = vmul.f32 %v1516, %v1550
        %v1559 = vmul.f32 %v1518, %v1551
        %v1560 = vmul.f32 %v1520, %v1552
        %v1561 = vpack.c.bf16 %v1553, %v1553
        %v1562 = vpack.c.bf16 %v1554, %v1554
        %v1563 = vpack.c.bf16 %v1555, %v1555
        %v1564 = vpack.c.bf16 %v1556, %v1556
        %v1565 = vpack.c.bf16 %v1557, %v1557
        %v1566 = vpack.c.bf16 %v1558, %v1558
        %v1567 = vpack.c.bf16 %v1559, %v1559
        %v1568 = vpack.c.bf16 %v1560, %v1560
        %v1570 = vsel %vm1472, %v1561, 0
        %vm1572 = vcmask 1043456
        %v1574 = vsel %vm1572, %v1043, 0
        %1576 = vmatprep.subr.bf16.mxu0 0
        %1577 = vmatpush1.bf16.msra.mxu0 %v1574
        %1578 = vmatprep.subr.bf16.mxu0 0
        %1579 = vmatpush1.bf16.msra.mxu0 0
        %1580 = vmatprep.subr.bf16.mxu0 0
        %1581 = vmatpush1.bf16.msra.mxu0 0
        %1582 = vmatprep.subr.bf16.mxu0 0
        %1583 = vmatpush1.bf16.msra.mxu0 0
        %1584 = vmatprep.subr.bf16.mxu0 0
        %1585 = vmatpush1.bf16.msra.mxu0 0
        %1586 = vmatprep.subr.bf16.mxu0 0
        %1587 = vmatpush1.bf16.msra.mxu0 0
        %1588 = vmatprep.subr.bf16.mxu0 0
        %1589 = vmatpush1.bf16.msra.mxu0 0
        %1590 = vmatprep.subr.bf16.mxu0 0
        %1591 = vmatpush1.bf16.msra.mxu0 0
        %1592 = vmatprep.subr.bf16.mxu0 0
        %1593 = vmatpush1.bf16.msra.mxu0 0
        %1594 = vmatprep.subr.bf16.mxu0 0
        %1595 = vmatpush1.bf16.msra.mxu0 0
        %1596 = vmatprep.subr.bf16.mxu0 0
        %1597 = vmatpush1.bf16.msra.mxu0 0
        %1598 = vmatprep.subr.bf16.mxu0 0
        %1599 = vmatpush1.bf16.msra.mxu0 0
        %1600 = vmatprep.subr.bf16.mxu0 0
        %1601 = vmatpush1.bf16.msra.mxu0 0
        %1602 = vmatprep.subr.bf16.mxu0 0
        %1603 = vmatpush1.bf16.msra.mxu0 0
        %1604 = vmatprep.subr.bf16.mxu0 0
        %1605 = vmatpush1.bf16.msra.mxu0 0
        %1606 = vmatprep.subr.bf16.mxu0 0
        %1607 = vmatpush1.bf16.msra.mxu0 0
        %1608 = vmatprep.mubr.bf16.mxu0 0
        %1609 = vmatmul.mubr.bf16.gmra.mrb[0].mxu0 %v1570
        %v1610 = vpop.f32.mrb[0].mxu0
        %v1611 = vadd.f32 0.0, %v1610
        %v1612 = vpop.f32.mrb[0].mxu0
        %v1613 = vpop.f32.mrb[0].mxu0
        %v1614 = vpop.f32.mrb[0].mxu0
        %1615 = vdwg.mxu0
        %v1617 = vsel %vm1472, %v1562, 0
        %v1620 = vsel %vm1572, %v1044, 0
        %1622 = vmatprep.subr.bf16.mxu0 0
        %1623 = vmatpush1.bf16.msra.mxu0 %v1620
        %1624 = vmatprep.subr.bf16.mxu0 0
        %1625 = vmatpush1.bf16.msra.mxu0 0
        %1626 = vmatprep.subr.bf16.mxu0 0
        %1627 = vmatpush1.bf16.msra.mxu0 0
        %1628 = vmatprep.subr.bf16.mxu0 0
        %1629 = vmatpush1.bf16.msra.mxu0 0
        %1630 = vmatprep.subr.bf16.mxu0 0
        %1631 = vmatpush1.bf16.msra.mxu0 0
        %1632 = vmatprep.subr.bf16.mxu0 0
        %1633 = vmatpush1.bf16.msra.mxu0 0
        %1634 = vmatprep.subr.bf16.mxu0 0
        %1635 = vmatpush1.bf16.msra.mxu0 0
        %1636 = vmatprep.subr.bf16.mxu0 0
        %1637 = vmatpush1.bf16.msra.mxu0 0
        %1638 = vmatprep.subr.bf16.mxu0 0
        %1639 = vmatpush1.bf16.msra.mxu0 0
        %1640 = vmatprep.subr.bf16.mxu0 0
        %1641 = vmatpush1.bf16.msra.mxu0 0
        %1642 = vmatprep.subr.bf16.mxu0 0
        %1643 = vmatpush1.bf16.msra.mxu0 0
        %1644 = vmatprep.subr.bf16.mxu0 0
        %1645 = vmatpush1.bf16.msra.mxu0 0
        %1646 = vmatprep.subr.bf16.mxu0 0
        %1647 = vmatpush1.bf16.msra.mxu0 0
        %1648 = vmatprep.subr.bf16.mxu0 0
        %1649 = vmatpush1.bf16.msra.mxu0 0
        %1650 = vmatprep.subr.bf16.mxu0 0
        %1651 = vmatpush1.bf16.msra.mxu0 0
        %1652 = vmatprep.subr.bf16.mxu0 0
        %1653 = vmatpush1.bf16.msra.mxu0 0
        %1654 = vmatprep.mubr.bf16.mxu0 0
        %1655 = vmatmul.mubr.bf16.gmra.mrb[0].mxu0 %v1617
        %v1656 = vpop.f32.mrb[0].mxu0
        %v1657 = vadd.f32 0.0, %v1656
        %v1658 = vpop.f32.mrb[0].mxu0
        %v1659 = vpop.f32.mrb[0].mxu0
        %v1660 = vpop.f32.mrb[0].mxu0
        %1661 = vdwg.mxu0
        %v1663 = vsel %vm1472, %v1563, 0
        %v1666 = vsel %vm1572, %v1070, 0
        %1668 = vmatprep.subr.bf16.mxu0 0
        %1669 = vmatpush1.bf16.msra.mxu0 %v1666
        %1670 = vmatprep.subr.bf16.mxu0 0
        %1671 = vmatpush1.bf16.msra.mxu0 0
        %1672 = vmatprep.subr.bf16.mxu0 0
        %1673 = vmatpush1.bf16.msra.mxu0 0
        %1674 = vmatprep.subr.bf16.mxu0 0
        %1675 = vmatpush1.bf16.msra.mxu0 0
        %1676 = vmatprep.subr.bf16.mxu0 0
        %1677 = vmatpush1.bf16.msra.mxu0 0
        %1678 = vmatprep.subr.bf16.mxu0 0
        %1679 = vmatpush1.bf16.msra.mxu0 0
        %1680 = vmatprep.subr.bf16.mxu0 0
        %1681 = vmatpush1.bf16.msra.mxu0 0
        %1682 = vmatprep.subr.bf16.mxu0 0
        %1683 = vmatpush1.bf16.msra.mxu0 0
        %1684 = vmatprep.subr.bf16.mxu0 0
        %1685 = vmatpush1.bf16.msra.mxu0 0
        %1686 = vmatprep.subr.bf16.mxu0 0
        %1687 = vmatpush1.bf16.msra.mxu0 0
        %1688 = vmatprep.subr.bf16.mxu0 0
        %1689 = vmatpush1.bf16.msra.mxu0 0
        %1690 = vmatprep.subr.bf16.mxu0 0
        %1691 = vmatpush1.bf16.msra.mxu0 0
        %1692 = vmatprep.subr.bf16.mxu0 0
        %1693 = vmatpush1.bf16.msra.mxu0 0
        %1694 = vmatprep.subr.bf16.mxu0 0
        %1695 = vmatpush1.bf16.msra.mxu0 0
        %1696 = vmatprep.subr.bf16.mxu0 0
        %1697 = vmatpush1.bf16.msra.mxu0 0
        %1698 = vmatprep.subr.bf16.mxu0 0
        %1699 = vmatpush1.bf16.msra.mxu0 0
        %1700 = vmatprep.mubr.bf16.mxu0 0
        %1701 = vmatmul.mubr.bf16.gmra.mrb[0].mxu0 %v1663
        %v1702 = vpop.f32.mrb[0].mxu0
        %v1703 = vadd.f32 0.0, %v1702
        %v1704 = vpop.f32.mrb[0].mxu0
        %v1705 = vpop.f32.mrb[0].mxu0
        %v1706 = vpop.f32.mrb[0].mxu0
        %1707 = vdwg.mxu0
        %v1709 = vsel %vm1472, %v1564, 0
        %v1712 = vsel %vm1572, %v1072, 0
        %1714 = vmatprep.subr.bf16.mxu0 0
        %1715 = vmatpush1.bf16.msra.mxu0 %v1712
        %1716 = vmatprep.subr.bf16.mxu0 0
        %1717 = vmatpush1.bf16.msra.mxu0 0
        %1718 = vmatprep.subr.bf16.mxu0 0
        %1719 = vmatpush1.bf16.msra.mxu0 0
        %1720 = vmatprep.subr.bf16.mxu0 0
        %1721 = vmatpush1.bf16.msra.mxu0 0
        %1722 = vmatprep.subr.bf16.mxu0 0
        %1723 = vmatpush1.bf16.msra.mxu0 0
        %1724 = vmatprep.subr.bf16.mxu0 0
        %1725 = vmatpush1.bf16.msra.mxu0 0
        %1726 = vmatprep.subr.bf16.mxu0 0
        %1727 = vmatpush1.bf16.msra.mxu0 0
        %1728 = vmatprep.subr.bf16.mxu0 0
        %1729 = vmatpush1.bf16.msra.mxu0 0
        %1730 = vmatprep.subr.bf16.mxu0 0
        %1731 = vmatpush1.bf16.msra.mxu0 0
        %1732 = vmatprep.subr.bf16.mxu0 0
        %1733 = vmatpush1.bf16.msra.mxu0 0
        %1734 = vmatprep.subr.bf16.mxu0 0
        %1735 = vmatpush1.bf16.msra.mxu0 0
        %1736 = vmatprep.subr.bf16.mxu0 0
        %1737 = vmatpush1.bf16.msra.mxu0 0
        %1738 = vmatprep.subr.bf16.mxu0 0
        %1739 = vmatpush1.bf16.msra.mxu0 0
        %1740 = vmatprep.subr.bf16.mxu0 0
        %1741 = vmatpush1.bf16.msra.mxu0 0
        %1742 = vmatprep.subr.bf16.mxu0 0
        %1743 = vmatpush1.bf16.msra.mxu0 0
        %1744 = vmatprep.subr.bf16.mxu0 0
        %1745 = vmatpush1.bf16.msra.mxu0 0
        %1746 = vmatprep.mubr.bf16.mxu0 0
        %1747 = vmatmul.mubr.bf16.gmra.mrb[0].mxu0 %v1709
        %v1748 = vpop.f32.mrb[0].mxu0
        %v1749 = vadd.f32 0.0, %v1748
        %v1750 = vpop.f32.mrb[0].mxu0
        %v1751 = vpop.f32.mrb[0].mxu0
        %v1752 = vpop.f32.mrb[0].mxu0
        %1753 = vdwg.mxu0
        %v1755 = vsel %vm1472, %v1565, 0
        %v1758 = vsel %vm1572, %v1074, 0
        %1760 = vmatprep.subr.bf16.mxu0 0
        %1761 = vmatpush1.bf16.msra.mxu0 %v1758
        %1762 = vmatprep.subr.bf16.mxu0 0
        %1763 = vmatpush1.bf16.msra.mxu0 0
        %1764 = vmatprep.subr.bf16.mxu0 0
        %1765 = vmatpush1.bf16.msra.mxu0 0
        %1766 = vmatprep.subr.bf16.mxu0 0
        %1767 = vmatpush1.bf16.msra.mxu0 0
        %1768 = vmatprep.subr.bf16.mxu0 0
        %1769 = vmatpush1.bf16.msra.mxu0 0
        %1770 = vmatprep.subr.bf16.mxu0 0
        %1771 = vmatpush1.bf16.msra.mxu0 0
        %1772 = vmatprep.subr.bf16.mxu0 0
        %1773 = vmatpush1.bf16.msra.mxu0 0
        %1774 = vmatprep.subr.bf16.mxu0 0
        %1775 = vmatpush1.bf16.msra.mxu0 0
        %1776 = vmatprep.subr.bf16.mxu0 0
        %1777 = vmatpush1.bf16.msra.mxu0 0
        %1778 = vmatprep.subr.bf16.mxu0 0
        %1779 = vmatpush1.bf16.msra.mxu0 0
        %1780 = vmatprep.subr.bf16.mxu0 0
        %1781 = vmatpush1.bf16.msra.mxu0 0
        %1782 = vmatprep.subr.bf16.mxu0 0
        %1783 = vmatpush1.bf16.msra.mxu0 0
        %1784 = vmatprep.subr.bf16.mxu0 0
        %1785 = vmatpush1.bf16.msra.mxu0 0
        %1786 = vmatprep.subr.bf16.mxu0 0
        %1787 = vmatpush1.bf16.msra.mxu0 0
        %1788 = vmatprep.subr.bf16.mxu0 0
        %1789 = vmatpush1.bf16.msra.mxu0 0
        %1790 = vmatprep.subr.bf16.mxu0 0
        %1791 = vmatpush1.bf16.msra.mxu0 0
        %1792 = vmatprep.mubr.bf16.mxu0 0
        %1793 = vmatmul.mubr.bf16.gmra.mrb[0].mxu0 %v1755
        %v1794 = vpop.f32.mrb[0].mxu0
        %v1795 = vadd.f32 0.0, %v1794
        %v1796 = vpop.f32.mrb[0].mxu0
        %v1797 = vpop.f32.mrb[0].mxu0
        %v1798 = vpop.f32.mrb[0].mxu0
        %1799 = vdwg.mxu0
        %v1801 = vsel %vm1472, %v1566, 0
        %v1804 = vsel %vm1572, %v1076, 0
        %1806 = vmatprep.subr.bf16.mxu0 0
        %1807 = vmatpush1.bf16.msra.mxu0 %v1804
        %1808 = vmatprep.subr.bf16.mxu0 0
        %1809 = vmatpush1.bf16.msra.mxu0 0
        %1810 = vmatprep.subr.bf16.mxu0 0
        %1811 = vmatpush1.bf16.msra.mxu0 0
        %1812 = vmatprep.subr.bf16.mxu0 0
        %1813 = vmatpush1.bf16.msra.mxu0 0
        %1814 = vmatprep.subr.bf16.mxu0 0
        %1815 = vmatpush1.bf16.msra.mxu0 0
        %1816 = vmatprep.subr.bf16.mxu0 0
        %1817 = vmatpush1.bf16.msra.mxu0 0
        %1818 = vmatprep.subr.bf16.mxu0 0
        %1819 = vmatpush1.bf16.msra.mxu0 0
        %1820 = vmatprep.subr.bf16.mxu0 0
        %1821 = vmatpush1.bf16.msra.mxu0 0
        %1822 = vmatprep.subr.bf16.mxu0 0
        %1823 = vmatpush1.bf16.msra.mxu0 0
        %1824 = vmatprep.subr.bf16.mxu0 0
        %1825 = vmatpush1.bf16.msra.mxu0 0
        %1826 = vmatprep.subr.bf16.mxu0 0
        %1827 = vmatpush1.bf16.msra.mxu0 0
        %1828 = vmatprep.subr.bf16.mxu0 0
        %1829 = vmatpush1.bf16.msra.mxu0 0
        %1830 = vmatprep.subr.bf16.mxu0 0
        %1831 = vmatpush1.bf16.msra.mxu0 0
        %1832 = vmatprep.subr.bf16.mxu0 0
        %1833 = vmatpush1.bf16.msra.mxu0 0
        %1834 = vmatprep.subr.bf16.mxu0 0
        %1835 = vmatpush1.bf16.msra.mxu0 0
        %1836 = vmatprep.subr.bf16.mxu0 0
        %1837 = vmatpush1.bf16.msra.mxu0 0
        %1838 = vmatprep.mubr.bf16.mxu0 0
        %1839 = vmatmul.mubr.bf16.gmra.mrb[0].mxu0 %v1801
        %v1840 = vpop.f32.mrb[0].mxu0
        %v1841 = vadd.f32 0.0, %v1840
        %v1842 = vpop.f32.mrb[0].mxu0
        %v1843 = vpop.f32.mrb[0].mxu0
        %v1844 = vpop.f32.mrb[0].mxu0
        %1845 = vdwg.mxu0
        %v1847 = vsel %vm1472, %v1567, 0
        %v1850 = vsel %vm1572, %v1078, 0
        %1852 = vmatprep.subr.bf16.mxu0 0
        %1853 = vmatpush1.bf16.msra.mxu0 %v1850
        %1854 = vmatprep.subr.bf16.mxu0 0
        %1855 = vmatpush1.bf16.msra.mxu0 0
        %1856 = vmatprep.subr.bf16.mxu0 0
        %1857 = vmatpush1.bf16.msra.mxu0 0
        %1858 = vmatprep.subr.bf16.mxu0 0
        %1859 = vmatpush1.bf16.msra.mxu0 0
        %1860 = vmatprep.subr.bf16.mxu0 0
        %1861 = vmatpush1.bf16.msra.mxu0 0
        %1862 = vmatprep.subr.bf16.mxu0 0
        %1863 = vmatpush1.bf16.msra.mxu0 0
        %1864 = vmatprep.subr.bf16.mxu0 0
        %1865 = vmatpush1.bf16.msra.mxu0 0
        %1866 = vmatprep.subr.bf16.mxu0 0
        %1867 = vmatpush1.bf16.msra.mxu0 0
        %1868 = vmatprep.subr.bf16.mxu0 0
        %1869 = vmatpush1.bf16.msra.mxu0 0
        %1870 = vmatprep.subr.bf16.mxu0 0
        %1871 = vmatpush1.bf16.msra.mxu0 0
        %1872 = vmatprep.subr.bf16.mxu0 0
        %1873 = vmatpush1.bf16.msra.mxu0 0
        %1874 = vmatprep.subr.bf16.mxu0 0
        %1875 = vmatpush1.bf16.msra.mxu0 0
        %1876 = vmatprep.subr.bf16.mxu0 0
        %1877 = vmatpush1.bf16.msra.mxu0 0
        %1878 = vmatprep.subr.bf16.mxu0 0
        %1879 = vmatpush1.bf16.msra.mxu0 0
        %1880 = vmatprep.subr.bf16.mxu0 0
        %1881 = vmatpush1.bf16.msra.mxu0 0
        %1882 = vmatprep.subr.bf16.mxu0 0
        %1883 = vmatpush1.bf16.msra.mxu0 0
        %1884 = vmatprep.mubr.bf16.mxu0 0
        %1885 = vmatmul.mubr.bf16.gmra.mrb[0].mxu0 %v1847
        %v1886 = vpop.f32.mrb[0].mxu0
        %v1887 = vadd.f32 0.0, %v1886
        %v1888 = vpop.f32.mrb[0].mxu0
        %v1889 = vpop.f32.mrb[0].mxu0
        %v1890 = vpop.f32.mrb[0].mxu0
        %1891 = vdwg.mxu0
        %v1893 = vsel %vm1472, %v1568, 0
        %v1896 = vsel %vm1572, %v1080, 0
        %1898 = vmatprep.subr.bf16.mxu0 0
        %1899 = vmatpush1.bf16.msra.mxu0 %v1896
        %1900 = vmatprep.subr.bf16.mxu0 0
        %1901 = vmatpush1.bf16.msra.mxu0 0
        %1902 = vmatprep.subr.bf16.mxu0 0
        %1903 = vmatpush1.bf16.msra.mxu0 0
        %1904 = vmatprep.subr.bf16.mxu0 0
        %1905 = vmatpush1.bf16.msra.mxu0 0
        %1906 = vmatprep.subr.bf16.mxu0 0
        %1907 = vmatpush1.bf16.msra.mxu0 0
        %1908 = vmatprep.subr.bf16.mxu0 0
        %1909 = vmatpush1.bf16.msra.mxu0 0
        %1910 = vmatprep.subr.bf16.mxu0 0
        %1911 = vmatpush1.bf16.msra.mxu0 0
        %1912 = vmatprep.subr.bf16.mxu0 0
        %1913 = vmatpush1.bf16.msra.mxu0 0
        %1914 = vmatprep.subr.bf16.mxu0 0
        %1915 = vmatpush1.bf16.msra.mxu0 0
        %1916 = vmatprep.subr.bf16.mxu0 0
        %1917 = vmatpush1.bf16.msra.mxu0 0
        %1918 = vmatprep.subr.bf16.mxu0 0
        %1919 = vmatpush1.bf16.msra.mxu0 0
        %1920 = vmatprep.subr.bf16.mxu0 0
        %1921 = vmatpush1.bf16.msra.mxu0 0
        %1922 = vmatprep.subr.bf16.mxu0 0
        %1923 = vmatpush1.bf16.msra.mxu0 0
        %1924 = vmatprep.subr.bf16.mxu0 0
        %1925 = vmatpush1.bf16.msra.mxu0 0
        %1926 = vmatprep.subr.bf16.mxu0 0
        %1927 = vmatpush1.bf16.msra.mxu0 0
        %1928 = vmatprep.subr.bf16.mxu0 0
        %1929 = vmatpush1.bf16.msra.mxu0 0
        %1930 = vmatprep.mubr.bf16.mxu0 0
        %1931 = vmatmul.mubr.bf16.gmra.mrb[0].mxu0 %v1893
        %v1932 = vpop.f32.mrb[0].mxu0
        %v1933 = vadd.f32 0.0, %v1932
        %v1934 = vpop.f32.mrb[0].mxu0
        %v1935 = vpop.f32.mrb[0].mxu0
        %v1936 = vpop.f32.mrb[0].mxu0
        %1937 = vdwg.mxu0
        %v1938 = vpack.c.bf16 %v1657, %v1611
        %v1939 = vpack.c.bf16 %v1749, %v1703
        %v1940 = vpack.c.bf16 %v1841, %v1795
        %v1941 = vpack.c.bf16 %v1933, %v1887
        %v1942 = vld [vmem:[%s605] sm:$0xf]
        %v1943 = vld [vmem:[%s605 + $0x4] sm:$0xf]
        %v1944 = vld [vmem:[%s605 + $0x8] sm:$0xf]
        %v1945 = vld [vmem:[%s605 + $0xc] sm:$0xf]
        %v1946 = vld [vmem:[%s605 + $0x10] sm:$0xf]
        %v1947 = vld [vmem:[%s605 + $0x14] sm:$0xf]
        %v1948 = vld [vmem:[%s605 + $0x18] sm:$0xf]
        %v1949 = vld [vmem:[%s605 + $0x1c] sm:$0xf]
        %v1950 = vld [vmem:[%s605 + $0x20] sm:$0xf]
        %v1951 = vld [vmem:[%s605 + $0x24] sm:$0xf]
        %v1952 = vld [vmem:[%s605 + $0x28] sm:$0xf]
        %v1953 = vld [vmem:[%s605 + $0x2c] sm:$0xf]
        %v1954 = vld [vmem:[%s605 + $0x30] sm:$0xf]
        %v1955 = vld [vmem:[%s605 + $0x34] sm:$0xf]
        %v1956 = vld [vmem:[%s605 + $0x38] sm:$0xf]
        %v1957 = vld [vmem:[%s605 + $0x3c] sm:$0xf]
        %v1962 = vunpack.c.l.b16 %v1942
        %v1963 = vunpack.c.l.b16 %v1943
        %v1964 = vunpack.c.l.b16 %v1944
        %v1965 = vunpack.c.l.b16 %v1945
        %v1966 = vpack.c.b16 %v1963, %v1962
        %v1967 = vpack.c.b16 %v1965, %v1964
        %v1971 = vsel %vm1081, %v1938, 0
        %1973 = vmatprep.subr.bf16.mxu0 0
        %1974 = vmatpush1.bf16.msra.mxu0 %v1966
        %1975 = vmatprep.subr.bf16.mxu0 0
        %1976 = vmatpush1.bf16.msra.mxu0 %v1967
        %1977 = vmatprep.subr.bf16.mxu0 0
        %1978 = vmatpush1.bf16.msra.mxu0 0
        %1979 = vmatprep.subr.bf16.mxu0 0
        %1980 = vmatpush1.bf16.msra.mxu0 0
        %1981 = vmatprep.subr.bf16.mxu0 0
        %1982 = vmatpush1.bf16.msra.mxu0 0
        %1983 = vmatprep.subr.bf16.mxu0 0
        %1984 = vmatpush1.bf16.msra.mxu0 0
        %1985 = vmatprep.subr.bf16.mxu0 0
        %1986 = vmatpush1.bf16.msra.mxu0 0
        %1987 = vmatprep.subr.bf16.mxu0 0
        %1988 = vmatpush1.bf16.msra.mxu0 0
        %1989 = vmatprep.subr.bf16.mxu0 0
        %1990 = vmatpush1.bf16.msra.mxu0 0
        %1991 = vmatprep.subr.bf16.mxu0 0
        %1992 = vmatpush1.bf16.msra.mxu0 0
        %1993 = vmatprep.subr.bf16.mxu0 0
        %1994 = vmatpush1.bf16.msra.mxu0 0
        %1995 = vmatprep.subr.bf16.mxu0 0
        %1996 = vmatpush1.bf16.msra.mxu0 0
        %1997 = vmatprep.subr.bf16.mxu0 0
        %1998 = vmatpush1.bf16.msra.mxu0 0
        %1999 = vmatprep.subr.bf16.mxu0 0
        %2000 = vmatpush1.bf16.msra.mxu0 0
        %2001 = vmatprep.subr.bf16.mxu0 0
        %2002 = vmatpush1.bf16.msra.mxu0 0
        %2003 = vmatprep.subr.bf16.mxu0 0
        %2004 = vmatpush1.bf16.msra.mxu0 0
        %2005 = vmatprep.mubr.bf16.mxu0 0
        %2006 = vmatmul.mubr.bf16.gmra.mrb[0].mxu0 %v1971
        %v2007 = vpop.f32.mrb[0].mxu0
        %v2008 = vadd.f32 0.0, %v2007
        %v2009 = vpop.f32.mrb[0].mxu0
        %v2010 = vpop.f32.mrb[0].mxu0
        %v2011 = vadd.f32 0.0, %v2010
        %v2012 = vpop.f32.mrb[0].mxu0
        %2013 = vdwg.mxu0
        %v2018 = vunpack.c.l.b16 %v1946
        %v2019 = vunpack.c.l.b16 %v1947
        %v2020 = vunpack.c.l.b16 %v1948
        %v2021 = vunpack.c.l.b16 %v1949
        %v2022 = vpack.c.b16 %v2019, %v2018
        %v2023 = vpack.c.b16 %v2021, %v2020
        %v2027 = vsel %vm1081, %v1939, 0
        %2029 = vmatprep.subr.bf16.mxu0 0
        %2030 = vmatpush1.bf16.msra.mxu0 %v2022
        %2031 = vmatprep.subr.bf16.mxu0 0
        %2032 = vmatpush1.bf16.msra.mxu0 %v2023
        %2033 = vmatprep.subr.bf16.mxu0 0
        %2034 = vmatpush1.bf16.msra.mxu0 0
        %2035 = vmatprep.subr.bf16.mxu0 0
        %2036 = vmatpush1.bf16.msra.mxu0 0
        %2037 = vmatprep.subr.bf16.mxu0 0
        %2038 = vmatpush1.bf16.msra.mxu0 0
        %2039 = vmatprep.subr.bf16.mxu0 0
        %2040 = vmatpush1.bf16.msra.mxu0 0
        %2041 = vmatprep.subr.bf16.mxu0 0
        %2042 = vmatpush1.bf16.msra.mxu0 0
        %2043 = vmatprep.subr.bf16.mxu0 0
        %2044 = vmatpush1.bf16.msra.mxu0 0
        %2045 = vmatprep.subr.bf16.mxu0 0
        %2046 = vmatpush1.bf16.msra.mxu0 0
        %2047 = vmatprep.subr.bf16.mxu0 0
        %2048 = vmatpush1.bf16.msra.mxu0 0
        %2049 = vmatprep.subr.bf16.mxu0 0
        %2050 = vmatpush1.bf16.msra.mxu0 0
        %2051 = vmatprep.subr.bf16.mxu0 0
        %2052 = vmatpush1.bf16.msra.mxu0 0
        %2053 = vmatprep.subr.bf16.mxu0 0
        %2054 = vmatpush1.bf16.msra.mxu0 0
        %2055 = vmatprep.subr.bf16.mxu0 0
        %2056 = vmatpush1.bf16.msra.mxu0 0
        %2057 = vmatprep.subr.bf16.mxu0 0
        %2058 = vmatpush1.bf16.msra.mxu0 0
        %2059 = vmatprep.subr.bf16.mxu0 0
        %2060 = vmatpush1.bf16.msra.mxu0 0
        %2061 = vmatprep.mubr.bf16.mxu0 0
        %2062 = vmatmul.mubr.bf16.gmra.mrb[0].mxu0 %v2027
        %v2063 = vpop.f32.mrb[0].mxu0
        %v2064 = vadd.f32 0.0, %v2063
        %v2065 = vpop.f32.mrb[0].mxu0
        %v2066 = vpop.f32.mrb[0].mxu0
        %v2067 = vadd.f32 0.0, %v2066
        %v2068 = vpop.f32.mrb[0].mxu0
        %2069 = vdwg.mxu0
        %v2074 = vunpack.c.l.b16 %v1950
        %v2075 = vunpack.c.l.b16 %v1951
        %v2076 = vunpack.c.l.b16 %v1952
        %v2077 = vunpack.c.l.b16 %v1953
        %v2078 = vpack.c.b16 %v2075, %v2074
        %v2079 = vpack.c.b16 %v2077, %v2076
        %v2083 = vsel %vm1081, %v1940, 0
        %2085 = vmatprep.subr.bf16.mxu0 0
        %2086 = vmatpush1.bf16.msra.mxu0 %v2078
        %2087 = vmatprep.subr.bf16.mxu0 0
        %2088 = vmatpush1.bf16.msra.mxu0 %v2079
        %2089 = vmatprep.subr.bf16.mxu0 0
        %2090 = vmatpush1.bf16.msra.mxu0 0
        %2091 = vmatprep.subr.bf16.mxu0 0
        %2092 = vmatpush1.bf16.msra.mxu0 0
        %2093 = vmatprep.subr.bf16.mxu0 0
        %2094 = vmatpush1.bf16.msra.mxu0 0
        %2095 = vmatprep.subr.bf16.mxu0 0
        %2096 = vmatpush1.bf16.msra.mxu0 0
        %2097 = vmatprep.subr.bf16.mxu0 0
        %2098 = vmatpush1.bf16.msra.mxu0 0
        %2099 = vmatprep.subr.bf16.mxu0 0
        %2100 = vmatpush1.bf16.msra.mxu0 0
        %2101 = vmatprep.subr.bf16.mxu0 0
        %2102 = vmatpush1.bf16.msra.mxu0 0
        %2103 = vmatprep.subr.bf16.mxu0 0
        %2104 = vmatpush1.bf16.msra.mxu0 0
        %2105 = vmatprep.subr.bf16.mxu0 0
        %2106 = vmatpush1.bf16.msra.mxu0 0
        %2107 = vmatprep.subr.bf16.mxu0 0
        %2108 = vmatpush1.bf16.msra.mxu0 0
        %2109 = vmatprep.subr.bf16.mxu0 0
        %2110 = vmatpush1.bf16.msra.mxu0 0
        %2111 = vmatprep.subr.bf16.mxu0 0
        %2112 = vmatpush1.bf16.msra.mxu0 0
        %2113 = vmatprep.subr.bf16.mxu0 0
        %2114 = vmatpush1.bf16.msra.mxu0 0
        %2115 = vmatprep.subr.bf16.mxu0 0
        %2116 = vmatpush1.bf16.msra.mxu0 0
        %2117 = vmatprep.mubr.bf16.mxu0 0
        %2118 = vmatmul.mubr.bf16.gmra.mrb[0].mxu0 %v2083
        %v2119 = vpop.f32.mrb[0].mxu0
        %v2120 = vadd.f32 0.0, %v2119
        %v2121 = vpop.f32.mrb[0].mxu0
        %v2122 = vpop.f32.mrb[0].mxu0
        %v2123 = vadd.f32 0.0, %v2122
        %v2124 = vpop.f32.mrb[0].mxu0
        %2125 = vdwg.mxu0
        %v2130 = vunpack.c.l.b16 %v1954
        %v2131 = vunpack.c.l.b16 %v1955
        %v2132 = vunpack.c.l.b16 %v1956
        %v2133 = vunpack.c.l.b16 %v1957
        %v2134 = vpack.c.b16 %v2131, %v2130
        %v2135 = vpack.c.b16 %v2133, %v2132
        %v2139 = vsel %vm1081, %v1941, 0
        %2141 = vmatprep.subr.bf16.mxu0 0
        %2142 = vmatpush1.bf16.msra.mxu0 %v2134
        %2143 = vmatprep.subr.bf16.mxu0 0
        %2144 = vmatpush1.bf16.msra.mxu0 %v2135
        %2145 = vmatprep.subr.bf16.mxu0 0
        %2146 = vmatpush1.bf16.msra.mxu0 0
        %2147 = vmatprep.subr.bf16.mxu0 0
        %2148 = vmatpush1.bf16.msra.mxu0 0
        %2149 = vmatprep.subr.bf16.mxu0 0
        %2150 = vmatpush1.bf16.msra.mxu0 0
        %2151 = vmatprep.subr.bf16.mxu0 0
        %2152 = vmatpush1.bf16.msra.mxu0 0
        %2153 = vmatprep.subr.bf16.mxu0 0
        %2154 = vmatpush1.bf16.msra.mxu0 0
        %2155 = vmatprep.subr.bf16.mxu0 0
        %2156 = vmatpush1.bf16.msra.mxu0 0
        %2157 = vmatprep.subr.bf16.mxu0 0
        %2158 = vmatpush1.bf16.msra.mxu0 0
        %2159 = vmatprep.subr.bf16.mxu0 0
        %2160 = vmatpush1.bf16.msra.mxu0 0
        %2161 = vmatprep.subr.bf16.mxu0 0
        %2162 = vmatpush1.bf16.msra.mxu0 0
        %2163 = vmatprep.subr.bf16.mxu0 0
        %2164 = vmatpush1.bf16.msra.mxu0 0
        %2165 = vmatprep.subr.bf16.mxu0 0
        %2166 = vmatpush1.bf16.msra.mxu0 0
        %2167 = vmatprep.subr.bf16.mxu0 0
        %2168 = vmatpush1.bf16.msra.mxu0 0
        %2169 = vmatprep.subr.bf16.mxu0 0
        %2170 = vmatpush1.bf16.msra.mxu0 0
        %2171 = vmatprep.subr.bf16.mxu0 0
        %2172 = vmatpush1.bf16.msra.mxu0 0
        %2173 = vmatprep.mubr.bf16.mxu0 0
        %2174 = vmatmul.mubr.bf16.gmra.mrb[0].mxu0 %v2139
        %v2175 = vpop.f32.mrb[0].mxu0
        %v2176 = vadd.f32 0.0, %v2175
        %v2177 = vpop.f32.mrb[0].mxu0
        %v2178 = vpop.f32.mrb[0].mxu0
        %v2179 = vadd.f32 0.0, %v2178
        %v2180 = vpop.f32.mrb[0].mxu0
        %2181 = vdwg.mxu0
        %v2182 = vadd.f32 %v2008, %v2064
        %v2183 = vadd.f32 %v2182, %v2120
        %v2184 = vadd.f32 %v2183, %v2176
        %v2185 = vadd.f32 %v2011, %v2067
        %v2186 = vadd.f32 %v2185, %v2123
        %v2187 = vadd.f32 %v2186, %v2179
        %v2188 = vld [vmem:[%s725] sm:$0x1]
        %v2190 = vlaneseq
        %v2191 = vshrl.u32 %v2190, 7
        %v2192 = vsub.s32 0, %v2191
        %v2193 = vrot.slane %v2188, %v2192
        %v2195 = vadd.f32 %v2184, %v2193
        %v2196 = vadd.f32 %v2187, %v2193
        %v2197 = vadd.f32 %v2195, %v763
        %v2198 = vadd.f32 %v2196, %v764
        %v2199 = vld [vmem:[%s728] sm:$0x1]
        %v2200 = vld [vmem:[%s731] sm:$0x1]
        %2201 = vadd.xlane.f32.xlu0 %v2197
        %v2202 = vpop.xlane.xlu0 %2201
        %2203 = vadd.xlane.f32.xlu0 %v2198
        %v2204 = vpop.xlane.xlu0 %2203
        %v2205 = vrcp.pop 128.0
        %v2206 = vmul.f32 %v2202, %v2205
        %v2207 = vmul.f32 %v2204, %v2205
        %v2208 = vsub.f32 %v2197, %v2206
        %v2209 = vsub.f32 %v2198, %v2207
        %v2210 = vmul.f32 %v2208, %v2208
        %v2211 = vmul.f32 %v2209, %v2209
        %2212 = vadd.xlane.f32.xlu0 %v2210
        %v2213 = vpop.xlane.xlu0 %2212
        %2214 = vadd.xlane.f32.xlu0 %v2211
        %v2215 = vpop.xlane.xlu0 %2214
        %v2216 = vmul.f32 %v2213, %v2205
        %v2217 = vmul.f32 %v2215, %v2205
        %v2218 = vadd.f32 %v2216, 1e-12
        %v2219 = vadd.f32 %v2217, 1e-12
        %v2220 = vrsqrt.pop %v2218
        %v2221 = vrsqrt.pop %v2219
        %v2222 = vmul.f32 %v2208, %v2220
        %v2223 = vmul.f32 %v2209, %v2221
        %v2225 = vlaneseq
        %v2226 = vshrl.u32 %v2225, 7
        %v2227 = vsub.s32 0, %v2226
        %v2228 = vrot.slane %v2199, %v2227
        %v2230 = vmul.f32 %v2222, %v2228
        %v2231 = vmul.f32 %v2223, %v2228
        %v2233 = vlaneseq
        %v2234 = vshrl.u32 %v2233, 7
        %v2235 = vsub.s32 0, %v2234
        %v2236 = vrot.slane %v2200, %v2235
        %v2238 = vadd.f32 %v2230, %v2236
        %v2239 = vadd.f32 %v2231, %v2236
        %v2240 = vpack.c.bf16 %v2239, %v2238
        %v2241 = vld [vmem:[%s736] sm:$0xff]
        %v2242 = vld [vmem:[%s736 + $0x8] sm:$0xff]
        %v2243 = vld [vmem:[%s736 + $0x10] sm:$0xff]
        %v2244 = vld [vmem:[%s736 + $0x18] sm:$0xff]
        %v2245 = vld [vmem:[%s736 + $0x20] sm:$0xff]
        %v2246 = vld [vmem:[%s736 + $0x28] sm:$0xff]
        %v2247 = vld [vmem:[%s736 + $0x30] sm:$0xff]
        %v2248 = vld [vmem:[%s736 + $0x38] sm:$0xff]
        %v2249 = vld [vmem:[%s736 + $0x40] sm:$0xff]
        %v2250 = vld [vmem:[%s736 + $0x48] sm:$0xff]
        %v2251 = vld [vmem:[%s736 + $0x50] sm:$0xff]
        %v2252 = vld [vmem:[%s736 + $0x58] sm:$0xff]
        %v2253 = vld [vmem:[%s736 + $0x60] sm:$0xff]
        %v2254 = vld [vmem:[%s736 + $0x68] sm:$0xff]
        %v2255 = vld [vmem:[%s736 + $0x70] sm:$0xff]
        %v2256 = vld [vmem:[%s736 + $0x78] sm:$0xff]
        %v2257 = vld [vmem:[%s740] sm:$0x3]
        %v2259 = vlaneseq
        %v2260 = vshrl.u32 %v2259, 7
        %v2261 = vsub.s32 0, %v2260
        %v2262 = vrot.slane %v2257, %v2261
        %v2263 = vlaneseq
        %v2264 = vshrl.u32 %v2263, 7
        %v2265 = vsub.s32 1, %v2264
        %v2266 = vrot.slane %v2257, %v2265
        %v2285 = vunpack.c.l.b16 %v2241
        %v2286 = vunpack.c.h.b16 %v2241
        %v2287 = vunpack.c.l.b16 %v2242
        %v2288 = vunpack.c.h.b16 %v2242
        %v2289 = vunpack.c.l.b16 %v2243
        %v2290 = vunpack.c.h.b16 %v2243
        %v2291 = vunpack.c.l.b16 %v2244
        %v2292 = vunpack.c.h.b16 %v2244
        %v2293 = vunpack.c.l.b16 %v2245
        %v2294 = vunpack.c.h.b16 %v2245
        %v2295 = vunpack.c.l.b16 %v2246
        %v2296 = vunpack.c.h.b16 %v2246
        %v2297 = vunpack.c.l.b16 %v2247
        %v2298 = vunpack.c.h.b16 %v2247
        %v2299 = vunpack.c.l.b16 %v2248
        %v2300 = vunpack.c.h.b16 %v2248
        %v2301 = vunpack.c.l.b16 %v2249
        %v2302 = vunpack.c.h.b16 %v2249
        %v2303 = vunpack.c.l.b16 %v2250
        %v2304 = vunpack.c.h.b16 %v2250
        %v2305 = vunpack.c.l.b16 %v2251
        %v2306 = vunpack.c.h.b16 %v2251
        %v2307 = vunpack.c.l.b16 %v2252
        %v2308 = vunpack.c.h.b16 %v2252
        %v2309 = vunpack.c.l.b16 %v2253
        %v2310 = vunpack.c.h.b16 %v2253
        %v2311 = vunpack.c.l.b16 %v2254
        %v2312 = vunpack.c.h.b16 %v2254
        %v2313 = vunpack.c.l.b16 %v2255
        %v2314 = vunpack.c.h.b16 %v2255
        %v2315 = vunpack.c.l.b16 %v2256
        %v2316 = vunpack.c.h.b16 %v2256
        %v2317 = vpack.c.b16 %v2287, %v2285
        %v2318 = vpack.c.b16 %v2288, %v2286
        %v2319 = vpack.c.b16 %v2291, %v2289
        %v2320 = vpack.c.b16 %v2292, %v2290
        %v2321 = vpack.c.b16 %v2295, %v2293
        %v2322 = vpack.c.b16 %v2296, %v2294
        %v2323 = vpack.c.b16 %v2299, %v2297
        %v2324 = vpack.c.b16 %v2300, %v2298
        %v2325 = vpack.c.b16 %v2303, %v2301
        %v2326 = vpack.c.b16 %v2304, %v2302
        %v2327 = vpack.c.b16 %v2307, %v2305
        %v2328 = vpack.c.b16 %v2308, %v2306
        %v2329 = vpack.c.b16 %v2311, %v2309
        %v2330 = vpack.c.b16 %v2312, %v2310
        %v2331 = vpack.c.b16 %v2315, %v2313
        %v2332 = vpack.c.b16 %v2316, %v2314
        %2349 = vmatprep.subr.bf16.mxu0 %v2318
        %2350 = vmatpush1.bf16.msra.mxu0 %v2317
        %2351 = vmatprep.subr.bf16.mxu0 %v2320
        %2352 = vmatpush1.bf16.msra.mxu0 %v2319
        %2353 = vmatprep.subr.bf16.mxu0 %v2322
        %2354 = vmatpush1.bf16.msra.mxu0 %v2321
        %2355 = vmatprep.subr.bf16.mxu0 %v2324
        %2356 = vmatpush1.bf16.msra.mxu0 %v2323
        %2357 = vmatprep.subr.bf16.mxu0 %v2326
        %2358 = vmatpush1.bf16.msra.mxu0 %v2325
        %2359 = vmatprep.subr.bf16.mxu0 %v2328
        %2360 = vmatpush1.bf16.msra.mxu0 %v2327
        %2361 = vmatprep.subr.bf16.mxu0 %v2330
        %2362 = vmatpush1.bf16.msra.mxu0 %v2329
        %2363 = vmatprep.subr.bf16.mxu0 %v2332
        %2364 = vmatpush1.bf16.msra.mxu0 %v2331
        %2365 = vmatprep.subr.bf16.mxu0 0
        %2366 = vmatpush1.bf16.msra.mxu0 0
        %2367 = vmatprep.subr.bf16.mxu0 0
        %2368 = vmatpush1.bf16.msra.mxu0 0
        %2369 = vmatprep.subr.bf16.mxu0 0
        %2370 = vmatpush1.bf16.msra.mxu0 0
        %2371 = vmatprep.subr.bf16.mxu0 0
        %2372 = vmatpush1.bf16.msra.mxu0 0
        %2373 = vmatprep.subr.bf16.mxu0 0
        %2374 = vmatpush1.bf16.msra.mxu0 0
        %2375 = vmatprep.subr.bf16.mxu0 0
        %2376 = vmatpush1.bf16.msra.mxu0 0
        %2377 = vmatprep.subr.bf16.mxu0 0
        %2378 = vmatpush1.bf16.msra.mxu0 0
        %2379 = vmatprep.subr.bf16.mxu0 0
        %2380 = vmatpush1.bf16.msra.mxu0 0
        %2381 = vmatprep.mubr.bf16.mxu0 0
        %2382 = vmatmul.mubr.bf16.gmra.mrb[0].mxu0 %v2240
        %v2383 = vpop.f32.mrb[0].mxu0
        %v2384 = vadd.f32 %v2262, %v2383
        %v2385 = vpop.f32.mrb[0].mxu0
        %v2386 = vadd.f32 %v2266, %v2385
        %v2387 = vpop.f32.mrb[0].mxu0
        %v2388 = vadd.f32 %v2262, %v2387
        %v2389 = vpop.f32.mrb[0].mxu0
        %v2390 = vadd.f32 %v2266, %v2389
        %2391 = vdwg.mxu0
        %v2392 = vmul.f32 %v2384, %v2384
        %v2393 = vmul.f32 %v2386, %v2386
        %v2394 = vmul.f32 %v2388, %v2388
        %v2395 = vmul.f32 %v2390, %v2390
        %v2396 = vmul.f32 %v2384, %v2392
        %v2397 = vmul.f32 %v2386, %v2393
        %v2398 = vmul.f32 %v2388, %v2394
        %v2399 = vmul.f32 %v2390, %v2395
        %v2400 = vmul.f32 %v2396, 0.044715
        %v2401 = vmul.f32 %v2397, 0.044715
        %v2402 = vmul.f32 %v2398, 0.044715
        %v2403 = vmul.f32 %v2399, 0.044715
        %v2404 = vadd.f32 %v2384, %v2400
        %v2405 = vadd.f32 %v2386, %v2401
        %v2406 = vadd.f32 %v2388, %v2402
        %v2407 = vadd.f32 %v2390, %v2403
        %v2408 = vmul.f32 %v2404, 0.7978846
        %v2409 = vmul.f32 %v2405, 0.7978846
        %v2410 = vmul.f32 %v2406, 0.7978846
        %v2411 = vmul.f32 %v2407, 0.7978846
        %v2412 = vtanh.pop %v2408
        %v2413 = vtanh.pop %v2409
        %v2414 = vtanh.pop %v2410
        %v2415 = vtanh.pop %v2411
        %v2416 = vadd.f32 %v2412, 1.0
        %v2417 = vadd.f32 %v2413, 1.0
        %v2418 = vadd.f32 %v2414, 1.0
        %v2419 = vadd.f32 %v2415, 1.0
        %v2420 = vmul.f32 %v2416, 0.5
        %v2421 = vmul.f32 %v2417, 0.5
        %v2422 = vmul.f32 %v2418, 0.5
        %v2423 = vmul.f32 %v2419, 0.5
        %v2424 = vmul.f32 %v2384, %v2420
        %v2425 = vmul.f32 %v2386, %v2421
        %v2426 = vmul.f32 %v2388, %v2422
        %v2427 = vmul.f32 %v2390, %v2423
        %v2428 = vpack.c.bf16 %v2426, %v2424
        %v2429 = vpack.c.bf16 %v2427, %v2425
        %v2430 = vld [vmem:[%s614] sm:$0xf]
        %v2431 = vld [vmem:[%s614 + $0x4] sm:$0xf]
        %v2432 = vld [vmem:[%s614 + $0x8] sm:$0xf]
        %v2433 = vld [vmem:[%s614 + $0xc] sm:$0xf]
        %v2434 = vld [vmem:[%s614 + $0x10] sm:$0xf]
        %v2435 = vld [vmem:[%s614 + $0x14] sm:$0xf]
        %v2436 = vld [vmem:[%s614 + $0x18] sm:$0xf]
        %v2437 = vld [vmem:[%s614 + $0x1c] sm:$0xf]
        %v2438 = vld [vmem:[%s614 + $0x20] sm:$0xf]
        %v2439 = vld [vmem:[%s614 + $0x24] sm:$0xf]
        %v2440 = vld [vmem:[%s614 + $0x28] sm:$0xf]
        %v2441 = vld [vmem:[%s614 + $0x2c] sm:$0xf]
        %v2442 = vld [vmem:[%s614 + $0x30] sm:$0xf]
        %v2443 = vld [vmem:[%s614 + $0x34] sm:$0xf]
        %v2444 = vld [vmem:[%s614 + $0x38] sm:$0xf]
        %v2445 = vld [vmem:[%s614 + $0x3c] sm:$0xf]
        %v2446 = vld [vmem:[%s614 + $0x40] sm:$0xf]
        %v2447 = vld [vmem:[%s614 + $0x44] sm:$0xf]
        %v2448 = vld [vmem:[%s614 + $0x48] sm:$0xf]
        %v2449 = vld [vmem:[%s614 + $0x4c] sm:$0xf]
        %v2450 = vld [vmem:[%s614 + $0x50] sm:$0xf]
        %v2451 = vld [vmem:[%s614 + $0x54] sm:$0xf]
        %v2452 = vld [vmem:[%s614 + $0x58] sm:$0xf]
        %v2453 = vld [vmem:[%s614 + $0x5c] sm:$0xf]
        %v2454 = vld [vmem:[%s614 + $0x60] sm:$0xf]
        %v2455 = vld [vmem:[%s614 + $0x64] sm:$0xf]
        %v2456 = vld [vmem:[%s614 + $0x68] sm:$0xf]
        %v2457 = vld [vmem:[%s614 + $0x6c] sm:$0xf]
        %v2458 = vld [vmem:[%s614 + $0x70] sm:$0xf]
        %v2459 = vld [vmem:[%s614 + $0x74] sm:$0xf]
        %v2460 = vld [vmem:[%s614 + $0x78] sm:$0xf]
        %v2461 = vld [vmem:[%s614 + $0x7c] sm:$0xf]
        %v2462 = vld [vmem:[%s743] sm:$0x1]
        %v2464 = vlaneseq
        %v2465 = vshrl.u32 %v2464, 7
        %v2466 = vsub.s32 0, %v2465
        %v2467 = vrot.slane %v2462, %v2466
        %v2501 = vunpack.c.l.b16 %v2430
        %v2502 = vunpack.c.l.b16 %v2431
        %v2503 = vunpack.c.l.b16 %v2432
        %v2504 = vunpack.c.l.b16 %v2433
        %v2505 = vunpack.c.l.b16 %v2434
        %v2506 = vunpack.c.l.b16 %v2435
        %v2507 = vunpack.c.l.b16 %v2436
        %v2508 = vunpack.c.l.b16 %v2437
        %v2509 = vunpack.c.l.b16 %v2438
        %v2510 = vunpack.c.l.b16 %v2439
        %v2511 = vunpack.c.l.b16 %v2440
        %v2512 = vunpack.c.l.b16 %v2441
        %v2513 = vunpack.c.l.b16 %v2442
        %v2514 = vunpack.c.l.b16 %v2443
        %v2515 = vunpack.c.l.b16 %v2444
        %v2516 = vunpack.c.l.b16 %v2445
        %v2517 = vunpack.c.l.b16 %v2446
        %v2518 = vunpack.c.l.b16 %v2447
        %v2519 = vunpack.c.l.b16 %v2448
        %v2520 = vunpack.c.l.b16 %v2449
        %v2521 = vunpack.c.l.b16 %v2450
        %v2522 = vunpack.c.l.b16 %v2451
        %v2523 = vunpack.c.l.b16 %v2452
        %v2524 = vunpack.c.l.b16 %v2453
        %v2525 = vunpack.c.l.b16 %v2454
        %v2526 = vunpack.c.l.b16 %v2455
        %v2527 = vunpack.c.l.b16 %v2456
        %v2528 = vunpack.c.l.b16 %v2457
        %v2529 = vunpack.c.l.b16 %v2458
        %v2530 = vunpack.c.l.b16 %v2459
        %v2531 = vunpack.c.l.b16 %v2460
        %v2532 = vunpack.c.l.b16 %v2461
        %v2533 = vpack.c.b16 %v2502, %v2501
        %v2534 = vpack.c.b16 %v2504, %v2503
        %v2535 = vpack.c.b16 %v2506, %v2505
        %v2536 = vpack.c.b16 %v2508, %v2507
        %v2537 = vpack.c.b16 %v2510, %v2509
        %v2538 = vpack.c.b16 %v2512, %v2511
        %v2539 = vpack.c.b16 %v2514, %v2513
        %v2540 = vpack.c.b16 %v2516, %v2515
        %v2541 = vpack.c.b16 %v2518, %v2517
        %v2542 = vpack.c.b16 %v2520, %v2519
        %v2543 = vpack.c.b16 %v2522, %v2521
        %v2544 = vpack.c.b16 %v2524, %v2523
        %v2545 = vpack.c.b16 %v2526, %v2525
        %v2546 = vpack.c.b16 %v2528, %v2527
        %v2547 = vpack.c.b16 %v2530, %v2529
        %v2548 = vpack.c.b16 %v2532, %v2531
        %2565 = vmatprep.subr.bf16.mxu0 0
        %2566 = vmatpush1.bf16.msra.mxu0 %v2533
        %2567 = vmatprep.subr.bf16.mxu0 0
        %2568 = vmatpush1.bf16.msra.mxu0 %v2534
        %2569 = vmatprep.subr.bf16.mxu0 0
        %2570 = vmatpush1.bf16.msra.mxu0 %v2535
        %2571 = vmatprep.subr.bf16.mxu0 0
        %2572 = vmatpush1.bf16.msra.mxu0 %v2536
        %2573 = vmatprep.subr.bf16.mxu0 0
        %2574 = vmatpush1.bf16.msra.mxu0 %v2537
        %2575 = vmatprep.subr.bf16.mxu0 0
        %2576 = vmatpush1.bf16.msra.mxu0 %v2538
        %2577 = vmatprep.subr.bf16.mxu0 0
        %2578 = vmatpush1.bf16.msra.mxu0 %v2539
        %2579 = vmatprep.subr.bf16.mxu0 0
        %2580 = vmatpush1.bf16.msra.mxu0 %v2540
        %2581 = vmatprep.subr.bf16.mxu0 0
        %2582 = vmatpush1.bf16.msra.mxu0 %v2541
        %2583 = vmatprep.subr.bf16.mxu0 0
        %2584 = vmatpush1.bf16.msra.mxu0 %v2542
        %2585 = vmatprep.subr.bf16.mxu0 0
        %2586 = vmatpush1.bf16.msra.mxu0 %v2543
        %2587 = vmatprep.subr.bf16.mxu0 0
        %2588 = vmatpush1.bf16.msra.mxu0 %v2544
        %2589 = vmatprep.subr.bf16.mxu0 0
        %2590 = vmatpush1.bf16.msra.mxu0 %v2545
        %2591 = vmatprep.subr.bf16.mxu0 0
        %2592 = vmatpush1.bf16.msra.mxu0 %v2546
        %2593 = vmatprep.subr.bf16.mxu0 0
        %2594 = vmatpush1.bf16.msra.mxu0 %v2547
        %2595 = vmatprep.subr.bf16.mxu0 0
        %2596 = vmatpush1.bf16.msra.mxu0 %v2548
        %2597 = vmatprep.mubr.bf16.mxu0 %v2429
        %2598 = vmatmul.mubr.bf16.gmra.mrb[0].mxu0 %v2428
        %v2599 = vpop.f32.mrb[0].mxu0
        %v2600 = vadd.f32 %v2467, %v2599
        %v2601 = vpop.f32.mrb[0].mxu0
        %v2602 = vpop.f32.mrb[0].mxu0
        %v2603 = vadd.f32 %v2467, %v2602
        %v2604 = vpop.f32.mrb[0].mxu0
        %2605 = vdwg.mxu0
        %v2606 = vadd.f32 %v2600, %v2238
        %v2607 = vadd.f32 %v2603, %v2239
        %v2608 = vld [vmem:[%s746] sm:$0x1]
        %v2609 = vld [vmem:[%s749] sm:$0x1]
        %2610 = vadd.xlane.f32.xlu0 %v2606
        %v2611 = vpop.xlane.xlu0 %2610
        %2612 = vadd.xlane.f32.xlu0 %v2607
        %v2613 = vpop.xlane.xlu0 %2612
        %v2614 = vmul.f32 %v2611, %v2205
        %v2615 = vmul.f32 %v2613, %v2205
        %v2616 = vsub.f32 %v2606, %v2614
        %v2617 = vsub.f32 %v2607, %v2615
        %v2618 = vmul.f32 %v2616, %v2616
        %v2619 = vmul.f32 %v2617, %v2617
        %2620 = vadd.xlane.f32.xlu0 %v2618
        %v2621 = vpop.xlane.xlu0 %2620
        %2622 = vadd.xlane.f32.xlu0 %v2619
        %v2623 = vpop.xlane.xlu0 %2622
        %v2624 = vmul.f32 %v2621, %v2205
        %v2625 = vmul.f32 %v2623, %v2205
        %v2626 = vadd.f32 %v2624, 1e-12
        %v2627 = vadd.f32 %v2625, 1e-12
        %v2628 = vrsqrt.pop %v2626
        %v2629 = vrsqrt.pop %v2627
        %v2630 = vmul.f32 %v2616, %v2628
        %v2631 = vmul.f32 %v2617, %v2629
        %v2633 = vlaneseq
        %v2634 = vshrl.u32 %v2633, 7
        %v2635 = vsub.s32 0, %v2634
        %v2636 = vrot.slane %v2608, %v2635
        %v2638 = vmul.f32 %v2630, %v2636
        %v2639 = vmul.f32 %v2631, %v2636
        %v2641 = vlaneseq
        %v2642 = vshrl.u32 %v2641, 7
        %v2643 = vsub.s32 0, %v2642
        %v2644 = vrot.slane %v2609, %v2643
        %v2646 = vadd.f32 %v2638, %v2644
        %v2647 = vadd.f32 %v2639, %v2644
        %2648 = vst [vmem:[#allocation2] sm:$0xff] %v2646
        %2649 = vst [vmem:[#allocation2 + $0x8] sm:$0xff] %v2647
        %p2650 = scmp.eq.s32.totalorder %s36, 1
        // Predicated region
        $region93: #{forward.1} parent=75 // pred_check
          %p2651 = pneg %p2650
        $region94: #{forward.1} parent=75 // pred_check_branch
          %2653 = sbr.rel (%p2651) target = $region96
        $region95: #{forward.1} parent=75 // pred_region
          %v2656 = vrot.slane %v2647, 7
          %vm2657 = vcmask 1041409
          %v2658 = vsel %vm2657, %v2656, %v2646
          %2660 = vst [vmem:[%s753] sm:$0x3] %v2658
        $region96: #{forward.1} parent=75 // pred_fallthru
          _
        %p2661 = scmp.lt.s32.totalorder %s35, 0
        %s2662 = scalar_select %p2661, %s35, 0
        %s2663 = smul.addr %s2662, 2
        %s2664 = scalar_lea.vmem %s14, %s2663
        // Predicated region
        $region97: #{forward.1} parent=75 // pred_check
          %p2665 = pneg %p425
        $region98: #{forward.1} parent=75 // pred_check_branch
          %2667 = sbr.rel (%p2665) target = $region100
        $region99: #{forward.1} parent=75 // pred_region
          _
        $region100: #{forward.1} parent=75 // pred_fallthru
          _
        // Predicated region
        $region101: #{forward.1} parent=75 // pred_check
          %p2668 = pneg %p425
        $region102: #{forward.1} parent=75 // pred_check_branch
          %2670 = sbr.rel (%p2668) target = $region104
        $region103: #{forward.1} parent=75 // pred_region
          %p2671 = scmp.lt.s32.totalorder %s35, 0
          %s2672 = scalar_select %p2671, %s35, 0
          %s2673 = smul.addr %s2672, 2
          %s2674 = scalar_lea.vmem %s14, %s2673
        $region104: #{forward.1} parent=75 // pred_fallthru
          _
      $region76: #{forward.1} parent=5 // pred_fallthru
        _
      %p2675 = scmp.le.s32.totalorder 2, %s26
      // Predicated region
      $region105: #{forward.1} parent=5 // pred_check
        %p2676 = pneg %p2675
      $region106: #{forward.1} parent=5 // pred_check_branch
        %2678 = sbr.rel (%p2676) target = $region108
      $region107: #{forward.1} parent=5 // pred_region
        %s2679 = ssub.s32 %s26, 2
      $region108: #{forward.1} parent=5 // pred_fallthru
        _
    $region6: #{forward.1} parent=1 // loop_footer
      %s30 = sadd.s32 1, %s26
    $region7: #{forward.1} parent=1 // loop_footer_branch
      %25 = sbr.rel target = $region3
    $region8: #{forward.1} parent=1 // loop_exit
      _
    %2680 = vsyncpa [#allocation4], 1
    %s2681 = scalar_lea.sflag [#allocation4], 1
    %2682 = vsyncpa %s2681, 1
    %2683 = vsyncpa [#allocation6], 1
    %s2684 = scalar_lea.sflag [#allocation6], 1
    %2685 = vsyncpa %s2684, 1

</llo_original>
